<compile_context>
chip_gen: v6e
topology: v6e:2x2x1
jax: 0.10.0
libtpu: 0.0.40
codegen_flags: <defaults>
</compile_context>

<pallas_src>
import functools

import jax
import jax.numpy as jnp
from jax.experimental import pallas as pl
from jax.experimental.pallas import tpu as pltpu


# ----------------------------- Pallas kernel --------------------------------

def _conv3x3_kernel(*refs, stride, Ho, Wo, has_sc, apply_relu):
    """Fused 3x3 conv (pad=1, given stride) + folded-BN bias (+ fused shortcut
    contraction) + optional ReLU for one (batch, Cout-tile) grid block.

    The 3x3 conv is 9 accumulated MXU matmuls over statically shifted windows of
    the phase-decomposed padded input held in VMEM (no im2col in HBM)."""
    if has_sc:
        x_ref, w_ref, b_ref, sc_ref, wsc_ref, o_ref = refs
    else:
        x_ref, w_ref, b_ref, o_ref = refs

    M = Ho * Wo
    acc = None
    for ky in range(3):
        for kx in range(3):
            p = (ky % stride) * stride + (kx % stride)    # phase plane index
            dy, dx = ky // stride, kx // stride           # static offset in plane
            a = x_ref[p, dy:dy + Ho, dx:dx + Wo, :]       # (Ho, Wo, Cin) bf16
            a = a.reshape(M, a.shape[-1])                 # (M, Cin)
            c = jnp.dot(a, w_ref[ky * 3 + kx],            # bf16 x bf16 -> f32 MXU
                        preferred_element_type=jnp.float32)
            acc = c if acc is None else acc + c           # first tap inits (no zero-fill)

    if has_sc:
        # 1x1 shortcut fused into the same contraction / accumulator.
        acc = acc + jnp.dot(sc_ref[0], wsc_ref[...],
                            preferred_element_type=jnp.float32)

    out = acc + b_ref[...]                                # folded BN bias (f32)
    if apply_relu:
        out = jnp.maximum(out, 0.0)
    o_ref[0] = out.astype(o_ref.dtype)


def fused_conv3x3(xph, w9, bias, *, stride, Ho, Wo, sc_in=None, w_sc=None,
                  apply_relu, out_dtype, tn_cap=256):
    """out[n] = maybe_relu( conv3x3(x[n]) + bias [+ sc_in[n] @ w_sc] ).

    xph : (N*s*s, Ht, Wt, Cin)  bf16 phase-decomposed, padded activations
    w9  : (9, Cin, Cout)        bf16, BN scale folded, tap order ky*3+kx
    bias: (1, Cout)             f32 folded BN bias (incl. shortcut BN bias)
    sc_in: (N, Ho*Wo, Csc) bf16 / w_sc: (Csc, Cout) bf16  (optional fused shortcut)
    returns (N, Ho*Wo, Cout) in out_dtype.
    """
    s2 = stride * stride
    NSS, Ht, Wt, Cin = xph.shape
    N = NSS // s2
    Cout = w9.shape[-1]
    M = Ho * Wo
    assert w9.shape == (9, Cin, Cout) and bias.shape == (1, Cout)

    # Cout tile: full-width when it fits, otherwise 256-aligned (MXU native on
    # v6e/v7x) with a ragged last block (masked stores).
    tn = Cout if Cout <= tn_cap else tn_cap
    grid = (N, pl.cdiv(Cout, tn))

    in_specs = [
        pl.BlockSpec((s2, Ht, Wt, Cin), lambda n, j: (n, 0, 0, 0)),  # activations
        pl.BlockSpec((9, Cin, tn), lambda n, j: (0, 0, j)),          # BN-scaled weights
        pl.BlockSpec((1, tn), lambda n, j: (0, j)),                  # folded BN bias
    ]
    operands = [xph, w9, bias]

    has_sc = sc_in is not None
    if has_sc:
        Csc = sc_in.shape[-1]
        assert sc_in.shape == (N, M, Csc) and w_sc.shape == (Csc, Cout)
        in_specs += [
            pl.BlockSpec((1, M, Csc), lambda n, j: (n, 0, 0)),       # shortcut input
            pl.BlockSpec((Csc, tn), lambda n, j: (0, j)),            # shortcut weights
        ]
        operands += [sc_in, w_sc]

    kernel = functools.partial(_conv3x3_kernel, stride=stride, Ho=Ho, Wo=Wo,
                               has_sc=has_sc, apply_relu=apply_relu)

    return pl.pallas_call(
        kernel,
        out_shape=jax.ShapeDtypeStruct((N, M, Cout), out_dtype),
        grid_spec=pltpu.PrefetchScalarGridSpec(
            num_scalar_prefetch=0,
            grid=grid,
            in_specs=in_specs,
            out_specs=pl.BlockSpec((1, M, tn), lambda n, j: (n, 0, j)),
        ),
        compiler_params=pltpu.CompilerParams(
            dimension_semantics=("parallel", "parallel"),
        ),
    )(*operands)


# ------------------------------ JAX glue -------------------------------------

def _phase_decompose(x_nhwc, stride):
    """(N,H,W,C) -> (N*stride^2, Ht, Wt, C): pad-by-1 then split into stride^2
    phases so every 3x3 tap becomes an UNstrided, statically shifted window.
    One read+write of the activation (vs 9x for an HBM im2col)."""
    N, H, W, C = x_nhwc.shape
    Ho = (H - 1) // stride + 1
    Wo = (W - 1) // stride + 1
    Ht = Ho + 2 // stride
    Wt = Wo + 2 // stride
    xp = jnp.pad(x_nhwc, ((0, 0), (1, 1), (1, 1), (0, 0)))
    phases = []
    for py in range(stride):
        for px in range(stride):
            ph = xp[:, py::stride, px::stride, :][:, :Ht, :Wt, :]
            ph = jnp.pad(ph, ((0, 0), (0, Ht - ph.shape[1]),
                              (0, Wt - ph.shape[2]), (0, 0)))
            phases.append(ph)
    xph = jnp.stack(phases, axis=1).reshape(N * stride * stride, Ht, Wt, C)
    return xph, Ho, Wo


def _w3x3_to_taps(w_oihw):
    # (O, I, 3, 3) -> (9, I, O), tap index = ky*3 + kx.
    o, i = w_oihw.shape[0], w_oihw.shape[1]
    return jnp.transpose(w_oihw, (2, 3, 1, 0)).reshape(9, i, o)


def _fold_bn(bn, eps=1e-5):
    scale = bn["gamma"] / jnp.sqrt(bn["var"] + eps)
    bias = bn["beta"] - bn["mean"] * scale
    return scale[None, :], bias[None, :]


def basic_block_forward(params, x_nchw, stride):
    """Pallas-backed BasicBlock forward. Input/output are NCHW (PyTorch convention)."""
    cout = params["w1"].shape[0]
    x = jnp.transpose(x_nchw, (0, 2, 3, 1)).astype(jnp.float32)   # NHWC
    N, H, W, cin = x.shape
    x_bf = x.astype(jnp.bfloat16)

    # conv1 (3x3, stride) -> bn1 -> relu ; BN scale folded into weight taps.
    s1, b1 = _fold_bn(params["bn1"])
    w1 = (_w3x3_to_taps(params["w1"]) * s1).astype(jnp.bfloat16)     # (9, Cin, Cout)
    xph1, Ho, Wo = _phase_decompose(x_bf, stride)
    h1 = fused_conv3x3(xph1, w1, b1, stride=stride, Ho=Ho, Wo=Wo,
                       apply_relu=True, out_dtype=jnp.bfloat16)      # (N, Ho*Wo, Cout)
    h1_nhwc = h1.reshape(N, Ho, Wo, cout)

    # conv2 (3x3, stride 1) -> bn2 -> + shortcut -> relu, shortcut fused into the
    # same contraction (projection weights, or identity matrix for the plain skip).
    s2, b2 = _fold_bn(params["bn2"])
    w2 = (_w3x3_to_taps(params["w2"]) * s2).astype(jnp.bfloat16)     # (9, Cout, Cout)

    if stride != 1 or cin != cout:
        ssc, bsc = _fold_bn(params["bnsc"])
        w_sc = (jnp.transpose(params["wsc"].reshape(cout, cin)) * ssc).astype(jnp.bfloat16)
        sc_in = x_bf[:, ::stride, ::stride, :].reshape(N, Ho * Wo, cin)
        bias2 = b2 + bsc
    else:
        w_sc = jnp.eye(cout, dtype=jnp.bfloat16)
        sc_in = x_bf.reshape(N, Ho * Wo, cout)
        bias2 = b2

    xph2, Ho2, Wo2 = _phase_decompose(h1_nhwc, 1)
    out = fused_conv3x3(xph2, w2, bias2, stride=1, Ho=Ho2, Wo=Wo2,
                        sc_in=sc_in, w_sc=w_sc, apply_relu=True,
                        out_dtype=jnp.float32)                        # (N, Ho*Wo, Cout)
    return jnp.transpose(out.reshape(N, Ho, Wo, cout), (0, 3, 1, 2))  # back to NCHW


# ------------------------- deterministic parameters ---------------------------

def init_params(key, in_channels, out_channels, stride):
    ks = jax.random.split(key, 12)

    def bn_params(k0, k1, k2, k3, c):
        return {
            "gamma": jax.random.uniform(k0, (c,), jnp.float32, 0.5, 1.5),
            "beta":  jax.random.normal(k1, (c,), jnp.float32) * 0.1,
            "mean":  jax.random.normal(k2, (c,), jnp.float32) * 0.1,
            "var":   jax.random.uniform(k3, (c,), jnp.float32, 0.5, 1.5),
        }

    params = {
        "w1": jax.random.normal(ks[0], (out_channels, in_channels, 3, 3), jnp.float32) * 0.1,
        "bn1": bn_params(ks[1], ks[2], ks[3], ks[4], out_channels),
        "w2": jax.random.normal(ks[5], (out_channels, out_channels, 3, 3), jnp.float32) * 0.1,
        "bn2": bn_params(ks[6], ks[7], ks[8], ks[9], out_channels),
    }
    if stride != 1 or in_channels != out_channels:
        params["wsc"] = jax.random.normal(ks[10], (out_channels, in_channels, 1, 1),
                                          jnp.float32) * 0.1
        params["bnsc"] = bn_params(*jax.random.split(ks[11], 4), out_channels)
    return params


# --------------------------- pure-JAX reference --------------------------------

def _ref_forward(params, x_nchw, stride):
    def conv(x, w, s, pad):
        return jax.lax.conv_general_dilated(
            x, w, (s, s), [(pad, pad), (pad, pad)],
            dimension_numbers=("NCHW", "OIHW", "NCHW"))

    def bn(x, p, eps=1e-5):
        scale = p["gamma"] / jnp.sqrt(p["var"] + eps)
        bias = p["beta"] - p["mean"] * scale
        return x * scale[None, :, None, None] + bias[None, :, None, None]

    h = jax.nn.relu(bn(conv(x_nchw, params["w1"], stride, 1), params["bn1"]))
    h = bn(conv(h, params["w2"], 1, 1), params["bn2"])
    if "wsc" in params:
        sc = bn(conv(x_nchw, params["wsc"], stride, 0), params["bnsc"])
    else:
        sc = x_nchw
    return jax.nn.relu(h + sc)


# ------------------------------------ main -------------------------------------

if __name__ == "__main__":
    key = jax.random.PRNGKey(0)
    k_x, k_p = jax.random.split(key)

    N, C_IN, C_OUT, H, W, STRIDE = 2, 4, 8, 16, 16, 2
    x = jax.random.normal(k_x, (N, C_IN, H, W), jnp.float32)
    params = init_params(k_p, C_IN, C_OUT, STRIDE)

    out = basic_block_forward(params, x, STRIDE)
    out = jax.block_until_ready(out)

    ref = jax.block_until_ready(_ref_forward(params, x, STRIDE))
    assert out.shape == ref.shape, (out.shape, ref.shape)
    # bf16 matmul path (incl. bf16 residual) vs f32 reference -> bf16-level tolerance.
    assert jnp.allclose(out, ref, atol=5e-2, rtol=5e-2), \
        float(jnp.max(jnp.abs(out - ref)))

    print("KERNEL_OK")
</pallas_src>

<mosaic_0001>
module attributes {stable_mosaic.version = 11 : i64} {
  func.func @_conv3x3_kernel(%arg0: i32, %arg1: i32, %arg2: memref<4x9x9x4xbf16, #tpu.memory_space<vmem>>, %arg3: memref<9x4x8xbf16, #tpu.memory_space<vmem>>, %arg4: memref<1x8xf32, #tpu.memory_space<vmem>>, %arg5: memref<1x64x8xbf16, #tpu.memory_space<vmem>>) attributes {dimension_semantics = [#tpu.dimension_semantics<parallel>, #tpu.dimension_semantics<parallel>], iteration_bounds = array<i64: 2, 1>, scalar_prefetch = 0 : i64, scratch_operands = 0 : i64, tpu.core_type = #tpu.core_type<tc>, window_params = [{transform_indices = @transform_0, window_bounds = array<i64: 4, 9, 9, 4>}, {transform_indices = @transform_1, window_bounds = array<i64: 9, 4, 8>}, {transform_indices = @transform_2, window_bounds = array<i64: 1, 8>}, {transform_indices = @transform_3, window_bounds = array<i64: 1, 64, 8>}]} {
    %c0 = arith.constant 0 : index
    %c0_0 = arith.constant 0 : index
    %c0_1 = arith.constant 0 : index
    %c0_2 = arith.constant 0 : index
    %0 = vector.load %arg2[%c0, %c0_0, %c0_1, %c0_2] : memref<4x9x9x4xbf16, #tpu.memory_space<vmem>>, vector<1x8x8x4xbf16>
    %1 = vector.shape_cast %0 : vector<1x8x8x4xbf16> to vector<8x8x4xbf16>
    %2 = vector.shape_cast %1 : vector<8x8x4xbf16> to vector<64x4xbf16>
    %c0_3 = arith.constant 0 : index
    %c0_4 = arith.constant 0 : index
    %c0_5 = arith.constant 0 : index
    %3 = vector.load %arg3[%c0_3, %c0_4, %c0_5] : memref<9x4x8xbf16, #tpu.memory_space<vmem>>, vector<1x4x8xbf16>
    %4 = vector.shape_cast %3 : vector<1x4x8xbf16> to vector<4x8xbf16>
    %cst = arith.constant dense<0.000000e+00> : vector<64x8xf32>
    %5 = tpu.matmul %2, %4, %cst {dimension_numbers = #tpu.dot_dimension_numbers<[1], [0], [0], [1], [0, 0, 1, 1], [], []>} : vector<64x4xbf16>, vector<4x8xbf16>, vector<64x8xf32> -> vector<64x8xf32>
    %c1 = arith.constant 1 : index
    %c0_6 = arith.constant 0 : index
    %c0_7 = arith.constant 0 : index
    %c0_8 = arith.constant 0 : index
    %6 = vector.load %arg2[%c1, %c0_6, %c0_7, %c0_8] : memref<4x9x9x4xbf16, #tpu.memory_space<vmem>>, vector<1x8x8x4xbf16>
    %7 = vector.shape_cast %6 : vector<1x8x8x4xbf16> to vector<8x8x4xbf16>
    %8 = vector.shape_cast %7 : vector<8x8x4xbf16> to vector<64x4xbf16>
    %c1_9 = arith.constant 1 : index
    %c0_10 = arith.constant 0 : index
    %c0_11 = arith.constant 0 : index
    %9 = vector.load %arg3[%c1_9, %c0_10, %c0_11] : memref<9x4x8xbf16, #tpu.memory_space<vmem>>, vector<1x4x8xbf16>
    %10 = vector.shape_cast %9 : vector<1x4x8xbf16> to vector<4x8xbf16>
    %cst_12 = arith.constant dense<0.000000e+00> : vector<64x8xf32>
    %11 = tpu.matmul %8, %10, %cst_12 {dimension_numbers = #tpu.dot_dimension_numbers<[1], [0], [0], [1], [0, 0, 1, 1], [], []>} : vector<64x4xbf16>, vector<4x8xbf16>, vector<64x8xf32> -> vector<64x8xf32>
    %12 = arith.addf %5, %11 : vector<64x8xf32>
    %c0_13 = arith.constant 0 : index
    %c0_14 = arith.constant 0 : index
    %c1_15 = arith.constant 1 : index
    %c0_16 = arith.constant 0 : index
    %13 = vector.load %arg2[%c0_13, %c0_14, %c1_15, %c0_16] : memref<4x9x9x4xbf16, #tpu.memory_space<vmem>>, vector<1x8x8x4xbf16>
    %14 = vector.shape_cast %13 : vector<1x8x8x4xbf16> to vector<8x8x4xbf16>
    %15 = vector.shape_cast %14 : vector<8x8x4xbf16> to vector<64x4xbf16>
    %c2 = arith.constant 2 : index
    %c0_17 = arith.constant 0 : index
    %c0_18 = arith.constant 0 : index
    %16 = vector.load %arg3[%c2, %c0_17, %c0_18] : memref<9x4x8xbf16, #tpu.memory_space<vmem>>, vector<1x4x8xbf16>
    %17 = vector.shape_cast %16 : vector<1x4x8xbf16> to vector<4x8xbf16>
    %cst_19 = arith.constant dense<0.000000e+00> : vector<64x8xf32>
    %18 = tpu.matmul %15, %17, %cst_19 {dimension_numbers = #tpu.dot_dimension_numbers<[1], [0], [0], [1], [0, 0, 1, 1], [], []>} : vector<64x4xbf16>, vector<4x8xbf16>, vector<64x8xf32> -> vector<64x8xf32>
    %19 = arith.addf %12, %18 : vector<64x8xf32>
    %c2_20 = arith.constant 2 : index
    %c0_21 = arith.constant 0 : index
    %c0_22 = arith.constant 0 : index
    %c0_23 = arith.constant 0 : index
    %20 = vector.load %arg2[%c2_20, %c0_21, %c0_22, %c0_23] : memref<4x9x9x4xbf16, #tpu.memory_space<vmem>>, vector<1x8x8x4xbf16>
    %21 = vector.shape_cast %20 : vector<1x8x8x4xbf16> to vector<8x8x4xbf16>
    %22 = vector.shape_cast %21 : vector<8x8x4xbf16> to vector<64x4xbf16>
    %c3 = arith.constant 3 : index
    %c0_24 = arith.constant 0 : index
    %c0_25 = arith.constant 0 : index
    %23 = vector.load %arg3[%c3, %c0_24, %c0_25] : memref<9x4x8xbf16, #tpu.memory_space<vmem>>, vector<1x4x8xbf16>
    %24 = vector.shape_cast %23 : vector<1x4x8xbf16> to vector<4x8xbf16>
    %cst_26 = arith.constant dense<0.000000e+00> : vector<64x8xf32>
    %25 = tpu.matmul %22, %24, %cst_26 {dimension_numbers = #tpu.dot_dimension_numbers<[1], [0], [0], [1], [0, 0, 1, 1], [], []>} : vector<64x4xbf16>, vector<4x8xbf16>, vector<64x8xf32> -> vector<64x8xf32>
    %26 = arith.addf %19, %25 : vector<64x8xf32>
    %c3_27 = arith.constant 3 : index
    %c0_28 = arith.constant 0 : index
    %c0_29 = arith.constant 0 : index
    %c0_30 = arith.constant 0 : index
    %27 = vector.load %arg2[%c3_27, %c0_28, %c0_29, %c0_30] : memref<4x9x9x4xbf16, #tpu.memory_space<vmem>>, vector<1x8x8x4xbf16>
    %28 = vector.shape_cast %27 : vector<1x8x8x4xbf16> to vector<8x8x4xbf16>
    %29 = vector.shape_cast %28 : vector<8x8x4xbf16> to vector<64x4xbf16>
    %c4 = arith.constant 4 : index
    %c0_31 = arith.constant 0 : index
    %c0_32 = arith.constant 0 : index
    %30 = vector.load %arg3[%c4, %c0_31, %c0_32] : memref<9x4x8xbf16, #tpu.memory_space<vmem>>, vector<1x4x8xbf16>
    %31 = vector.shape_cast %30 : vector<1x4x8xbf16> to vector<4x8xbf16>
    %cst_33 = arith.constant dense<0.000000e+00> : vector<64x8xf32>
    %32 = tpu.matmul %29, %31, %cst_33 {dimension_numbers = #tpu.dot_dimension_numbers<[1], [0], [0], [1], [0, 0, 1, 1], [], []>} : vector<64x4xbf16>, vector<4x8xbf16>, vector<64x8xf32> -> vector<64x8xf32>
    %33 = arith.addf %26, %32 : vector<64x8xf32>
    %c2_34 = arith.constant 2 : index
    %c0_35 = arith.constant 0 : index
    %c1_36 = arith.constant 1 : index
    %c0_37 = arith.constant 0 : index
    %34 = vector.load %arg2[%c2_34, %c0_35, %c1_36, %c0_37] : memref<4x9x9x4xbf16, #tpu.memory_space<vmem>>, vector<1x8x8x4xbf16>
    %35 = vector.shape_cast %34 : vector<1x8x8x4xbf16> to vector<8x8x4xbf16>
    %36 = vector.shape_cast %35 : vector<8x8x4xbf16> to vector<64x4xbf16>
    %c5 = arith.constant 5 : index
    %c0_38 = arith.constant 0 : index
    %c0_39 = arith.constant 0 : index
    %37 = vector.load %arg3[%c5, %c0_38, %c0_39] : memref<9x4x8xbf16, #tpu.memory_space<vmem>>, vector<1x4x8xbf16>
    %38 = vector.shape_cast %37 : vector<1x4x8xbf16> to vector<4x8xbf16>
    %cst_40 = arith.constant dense<0.000000e+00> : vector<64x8xf32>
    %39 = tpu.matmul %36, %38, %cst_40 {dimension_numbers = #tpu.dot_dimension_numbers<[1], [0], [0], [1], [0, 0, 1, 1], [], []>} : vector<64x4xbf16>, vector<4x8xbf16>, vector<64x8xf32> -> vector<64x8xf32>
    %40 = arith.addf %33, %39 : vector<64x8xf32>
    %c0_41 = arith.constant 0 : index
    %c1_42 = arith.constant 1 : index
    %c0_43 = arith.constant 0 : index
    %c0_44 = arith.constant 0 : index
    %41 = vector.load %arg2[%c0_41, %c1_42, %c0_43, %c0_44] : memref<4x9x9x4xbf16, #tpu.memory_space<vmem>>, vector<1x8x8x4xbf16>
    %42 = vector.shape_cast %41 : vector<1x8x8x4xbf16> to vector<8x8x4xbf16>
    %43 = vector.shape_cast %42 : vector<8x8x4xbf16> to vector<64x4xbf16>
    %c6 = arith.constant 6 : index
    %c0_45 = arith.constant 0 : index
    %c0_46 = arith.constant 0 : index
    %44 = vector.load %arg3[%c6, %c0_45, %c0_46] : memref<9x4x8xbf16, #tpu.memory_space<vmem>>, vector<1x4x8xbf16>
    %45 = vector.shape_cast %44 : vector<1x4x8xbf16> to vector<4x8xbf16>
    %cst_47 = arith.constant dense<0.000000e+00> : vector<64x8xf32>
    %46 = tpu.matmul %43, %45, %cst_47 {dimension_numbers = #tpu.dot_dimension_numbers<[1], [0], [0], [1], [0, 0, 1, 1], [], []>} : vector<64x4xbf16>, vector<4x8xbf16>, vector<64x8xf32> -> vector<64x8xf32>
    %47 = arith.addf %40, %46 : vector<64x8xf32>
    %c1_48 = arith.constant 1 : index
    %c1_49 = arith.constant 1 : index
    %c0_50 = arith.constant 0 : index
    %c0_51 = arith.constant 0 : index
    %48 = vector.load %arg2[%c1_48, %c1_49, %c0_50, %c0_51] : memref<4x9x9x4xbf16, #tpu.memory_space<vmem>>, vector<1x8x8x4xbf16>
    %49 = vector.shape_cast %48 : vector<1x8x8x4xbf16> to vector<8x8x4xbf16>
    %50 = vector.shape_cast %49 : vector<8x8x4xbf16> to vector<64x4xbf16>
    %c7 = arith.constant 7 : index
    %c0_52 = arith.constant 0 : index
    %c0_53 = arith.constant 0 : index
    %51 = vector.load %arg3[%c7, %c0_52, %c0_53] : memref<9x4x8xbf16, #tpu.memory_space<vmem>>, vector<1x4x8xbf16>
    %52 = vector.shape_cast %51 : vector<1x4x8xbf16> to vector<4x8xbf16>
    %cst_54 = arith.constant dense<0.000000e+00> : vector<64x8xf32>
    %53 = tpu.matmul %50, %52, %cst_54 {dimension_numbers = #tpu.dot_dimension_numbers<[1], [0], [0], [1], [0, 0, 1, 1], [], []>} : vector<64x4xbf16>, vector<4x8xbf16>, vector<64x8xf32> -> vector<64x8xf32>
    %54 = arith.addf %47, %53 : vector<64x8xf32>
    %c0_55 = arith.constant 0 : index
    %c1_56 = arith.constant 1 : index
    %c1_57 = arith.constant 1 : index
    %c0_58 = arith.constant 0 : index
    %55 = vector.load %arg2[%c0_55, %c1_56, %c1_57, %c0_58] : memref<4x9x9x4xbf16, #tpu.memory_space<vmem>>, vector<1x8x8x4xbf16>
    %56 = vector.shape_cast %55 : vector<1x8x8x4xbf16> to vector<8x8x4xbf16>
    %57 = vector.shape_cast %56 : vector<8x8x4xbf16> to vector<64x4xbf16>
    %c8 = arith.constant 8 : index
    %c0_59 = arith.constant 0 : index
    %c0_60 = arith.constant 0 : index
    %58 = vector.load %arg3[%c8, %c0_59, %c0_60] : memref<9x4x8xbf16, #tpu.memory_space<vmem>>, vector<1x4x8xbf16>
    %59 = vector.shape_cast %58 : vector<1x4x8xbf16> to vector<4x8xbf16>
    %cst_61 = arith.constant dense<0.000000e+00> : vector<64x8xf32>
    %60 = tpu.matmul %57, %59, %cst_61 {dimension_numbers = #tpu.dot_dimension_numbers<[1], [0], [0], [1], [0, 0, 1, 1], [], []>} : vector<64x4xbf16>, vector<4x8xbf16>, vector<64x8xf32> -> vector<64x8xf32>
    %61 = arith.addf %54, %60 : vector<64x8xf32>
    %c0_62 = arith.constant 0 : index
    %c0_63 = arith.constant 0 : index
    %62 = vector.load %arg4[%c0_62, %c0_63] : memref<1x8xf32, #tpu.memory_space<vmem>>, vector<1x8xf32>
    %63 = vector.broadcast %62 : vector<1x8xf32> to vector<64x8xf32>
    %64 = arith.addf %61, %63 : vector<64x8xf32>
    %cst_64 = arith.constant 0.000000e+00 : f32
    %65 = vector.broadcast %cst_64 : f32 to vector<64x8xf32>
    %66 = arith.maximumf %64, %65 : vector<64x8xf32>
    %67 = arith.truncf %66 : vector<64x8xf32> to vector<64x8xbf16>
    %c0_65 = arith.constant 0 : index
    %c0_66 = arith.constant 0 : index
    %c0_67 = arith.constant 0 : index
    %68 = vector.load %arg5[%c0_65, %c0_66, %c0_67] : memref<1x64x8xbf16, #tpu.memory_space<vmem>>, vector<1x64x8xbf16>
    %69 = vector.shape_cast %68 : vector<1x64x8xbf16> to vector<64x8xbf16>
    %70 = vector.shape_cast %67 : vector<64x8xbf16> to vector<1x64x8xbf16>
    tpu.vector_store %arg5[%c0_65, %c0_66, %c0_67], %70 {strides = array<i32>} : memref<1x64x8xbf16, #tpu.memory_space<vmem>>, vector<1x64x8xbf16>,
    return
  }
  func.func @transform_0(%arg0: i32, %arg1: i32) -> (i32, i32, i32, i32) {
    %c0_i32 = arith.constant 0 : i32
    %c0_i32_0 = arith.constant 0 : i32
    %c0_i32_1 = arith.constant 0 : i32
    %c0_i32_2 = arith.constant 0 : i32
    return %arg0, %c0_i32, %c0_i32_0, %c0_i32_1 : i32, i32, i32, i32
  }
  func.func @transform_1(%arg0: i32, %arg1: i32) -> (i32, i32, i32) {
    %c0_i32 = arith.constant 0 : i32
    %c0_i32_0 = arith.constant 0 : i32
    %c0_i32_1 = arith.constant 0 : i32
    return %c0_i32, %c0_i32_0, %arg1 : i32, i32, i32
  }
  func.func @transform_2(%arg0: i32, %arg1: i32) -> (i32, i32) {
    %c0_i32 = arith.constant 0 : i32
    %c0_i32_0 = arith.constant 0 : i32
    return %c0_i32, %arg1 : i32, i32
  }
  func.func @transform_3(%arg0: i32, %arg1: i32) -> (i32, i32, i32) {
    %c0_i32 = arith.constant 0 : i32
    %c0_i32_0 = arith.constant 0 : i32
    return %arg0, %c0_i32, %arg1 : i32, i32, i32
  }
}

</mosaic_0001>

<llo_original>
// kernel: tpu_custom_call.1
$region0: #{tpu_custom_call.1}
  #allocation0 [shape = 'u32[]', space=smem, size = 0x4, offset = 0x4, fixed_abs, tag = 'smem constant byte address 0x4 - core index']
  #allocation1 [shape = 'u32[144,128]{1,0:T(1,128)}', space=vmem, size = 0x12000, scoped, tag = 'internal scratch']
  %s0 = inlined_call_operand.vmem [shape: bf16[8,9,9,4], index: 0, kind: input, shape index: {}]
  %s1 = inlined_call_operand.vmem [shape: bf16[9,4,8], index: 1, kind: input, shape index: {}]
  %s2 = inlined_call_operand.vmem [shape: f32[1,8], index: 2, kind: input, shape index: {}]
  %s3 = inlined_call_operand.vmem [shape: bf16[2,64,8], index: 3, kind: output, shape index: {}]
  %s4 = sld [smem:[#allocation0]]
  $region45: #{tpu_custom_call.1} parent=0
    _
  %s6 = ssub.s32 1, %s4
  %s7 = scalar_select 0, %s6, %s4
  loop: start=0, step=1, limit=4
  $region2: #{tpu_custom_call.1} parent=0 // loop_pre_header
    _
  $region3: #{tpu_custom_call.1} parent=0 // loop_header
    %s9 = sphi 0, %s13
    %p10 = scmp.ge.s32.totalorder %s9, 4
    %s16 = sphi 0, %s28
    %s17 = sphi 0, %s24
    %s18 = sphi 0, %s16
    %s19 = sphi 0, %s17
    %s20 = sphi 0, %s18
    %s21 = sphi 0, %s19
    %s31 = sphi 0, %s33
    %s34 = sphi 0, %s31
    %s35 = sphi 0, %s34
    %s51 = sphi 0, %s35
    %s57 = sphi 0, %s59
    %s60 = sphi 0, %s57
    %s61 = sphi 0, %s60
    %s77 = sphi 0, %s61
    %s83 = sphi 0, %s85
    %s86 = sphi 0, %s83
    %s87 = sphi 0, %s86
    %s103 = sphi 0, %s87
    %s111 = sphi 0, %s113
    %s114 = sphi 0, %s111
    %s115 = sphi 0, %s114
    %s131 = sphi 0, %s115
  $region4: #{tpu_custom_call.1} parent=0 // loop_header_branch
    %12 = sbr.rel (%p10) target = $region8
  $region5: #{tpu_custom_call.1} parent=0 // loop_body
    %s14 = ssub.s32 %s9, 1
    %s15 = ssub.s32 %s9, 2
    %s22 = sadd.s32 1, %s17
    %p23 = scmp.ge.s32.totalorder %s22, 1
    %s24 = scalar_select %p23, 0, %s22
    %s25 = sadd.s32 1, %s16
    %s26 = scalar_select %p23, %s25, %s16
    %p27 = scmp.ge.s32.totalorder %s26, 2
    %s28 = scalar_select %p27, 0, %s26
    %s29 = ssub.s32 %s16, %s28
    %p30 = scmp.eq.s32.totalorder %s29, 0
    %s32 = sadd.s32 %s31, 1
    %s33 = scalar_select %p30, %s31, %s32
    %p36 = pneg %p30
    %p37 = scmp.eq.s32.totalorder %s9, 1
    %p38 = por %p36, %p37
    %p39 = scmp.ne.s32.totalorder %s31, %s34
    %p40 = scmp.eq.s32.totalorder %s9, 0
    %p41 = por %p39, %p40
    %p42 = scmp.ne.s32.totalorder %s31, %s34
    %p43 = scmp.eq.s32.totalorder %s14, 1
    %p44 = por %p42, %p43
    %p45 = scmp.ne.s32.totalorder %s34, %s35
    %p46 = scmp.eq.s32.totalorder %s14, 0
    %p47 = por %p45, %p46
    %p48 = scmp.ne.s32.totalorder %s34, %s35
    %p49 = scmp.eq.s32.totalorder %s15, 1
    %p50 = por %p48, %p49
    %p52 = scmp.ne.s32.totalorder %s35, %s51
    %p53 = scmp.eq.s32.totalorder %s15, 0
    %p54 = por %p52, %p53
    %s55 = ssub.s32 %s17, %s24
    %p56 = scmp.eq.s32.totalorder %s55, 0
    %s58 = sadd.s32 %s57, 1
    %s59 = scalar_select %p56, %s57, %s58
    %p62 = pneg %p56
    %p63 = scmp.eq.s32.totalorder %s9, 1
    %p64 = por %p62, %p63
    %p65 = scmp.ne.s32.totalorder %s57, %s60
    %p66 = scmp.eq.s32.totalorder %s9, 0
    %p67 = por %p65, %p66
    %p68 = scmp.ne.s32.totalorder %s57, %s60
    %p69 = scmp.eq.s32.totalorder %s14, 1
    %p70 = por %p68, %p69
    %p71 = scmp.ne.s32.totalorder %s60, %s61
    %p72 = scmp.eq.s32.totalorder %s14, 0
    %p73 = por %p71, %p72
    %p74 = scmp.ne.s32.totalorder %s60, %s61
    %p75 = scmp.eq.s32.totalorder %s15, 1
    %p76 = por %p74, %p75
    %p78 = scmp.ne.s32.totalorder %s61, %s77
    %p79 = scmp.eq.s32.totalorder %s15, 0
    %p80 = por %p78, %p79
    %s81 = ssub.s32 %s17, %s24
    %p82 = scmp.eq.s32.totalorder %s81, 0
    %s84 = sadd.s32 %s83, 1
    %s85 = scalar_select %p82, %s83, %s84
    %p88 = pneg %p82
    %p89 = scmp.eq.s32.totalorder %s9, 1
    %p90 = por %p88, %p89
    %p91 = scmp.ne.s32.totalorder %s83, %s86
    %p92 = scmp.eq.s32.totalorder %s9, 0
    %p93 = por %p91, %p92
    %p94 = scmp.ne.s32.totalorder %s83, %s86
    %p95 = scmp.eq.s32.totalorder %s14, 1
    %p96 = por %p94, %p95
    %p97 = scmp.ne.s32.totalorder %s86, %s87
    %p98 = scmp.eq.s32.totalorder %s14, 0
    %p99 = por %p97, %p98
    %p100 = scmp.ne.s32.totalorder %s86, %s87
    %p101 = scmp.eq.s32.totalorder %s15, 1
    %p102 = por %p100, %p101
    %p104 = scmp.ne.s32.totalorder %s87, %s103
    %p105 = scmp.eq.s32.totalorder %s15, 0
    %p106 = por %p104, %p105
    %s107 = ssub.s32 %s16, %s28
    %s108 = ssub.s32 %s17, %s24
    %s109 = sor.u32 %s107, %s108
    %p110 = scmp.eq.s32.totalorder %s109, 0
    %s112 = sadd.s32 %s111, 1
    %s113 = scalar_select %p110, %s111, %s112
    %p116 = pneg %p110
    %p117 = scmp.eq.s32.totalorder %s9, 1
    %p118 = por %p116, %p117
    %p119 = scmp.ne.s32.totalorder %s111, %s114
    %p120 = scmp.eq.s32.totalorder %s9, 0
    %p121 = por %p119, %p120
    %p122 = scmp.ne.s32.totalorder %s111, %s114
    %p123 = scmp.eq.s32.totalorder %s14, 1
    %p124 = por %p122, %p123
    %p125 = scmp.ne.s32.totalorder %s114, %s115
    %p126 = scmp.eq.s32.totalorder %s14, 0
    %p127 = por %p125, %p126
    %p128 = scmp.ne.s32.totalorder %s114, %s115
    %p129 = scmp.eq.s32.totalorder %s15, 1
    %p130 = por %p128, %p129
    %p132 = scmp.ne.s32.totalorder %s115, %s131
    %p133 = scmp.eq.s32.totalorder %s15, 0
    %p134 = por %p132, %p133
    %p135 = scmp.le.s32.totalorder 1, %s9
    %p136 = scmp.lt.s32.totalorder %s9, 3
    %p137 = pnand %p135, %p136
    %p138 = pneg %p137
    // Predicated region
    $region9: #{tpu_custom_call.1} parent=5 // pred_check
      _
    $region10: #{tpu_custom_call.1} parent=5 // pred_check_branch
      %140 = sbr.rel (%p137) target = $region12
    $region11: #{tpu_custom_call.1} parent=5 // pred_region
      %s141 = ssub.s32 %s9, 1
      // Predicated region
      $region13: #{tpu_custom_call.1} parent=11 // pred_check
        %p142 = pneg %p73
      $region14: #{tpu_custom_call.1} parent=11 // pred_check_branch
        %144 = sbr.rel (%p142) target = $region16
      $region15: #{tpu_custom_call.1} parent=11 // pred_region
        %p145 = scmp.lt.s32.totalorder %s19, 0
        %s146 = scalar_select %p145, %s19, 0
        %s147 = smul.addr %s146, 2
        %s148 = scalar_lea.vmem %s1, %s147
      $region16: #{tpu_custom_call.1} parent=11 // pred_fallthru
        _
      // Predicated region
      $region17: #{tpu_custom_call.1} parent=11 // pred_check
        %p149 = pneg %p99
      $region18: #{tpu_custom_call.1} parent=11 // pred_check_branch
        %151 = sbr.rel (%p149) target = $region20
      $region19: #{tpu_custom_call.1} parent=11 // pred_region
        %p152 = scmp.lt.s32.totalorder %s19, 0
        %s153 = scalar_select %p152, %s19, 0
        %s154 = scalar_lea.vmem %s2, %s153
      $region20: #{tpu_custom_call.1} parent=11 // pred_fallthru
        _
    $region12: #{tpu_custom_call.1} parent=5 // pred_fallthru
      _
    %p155 = scmp.lt.s32.totalorder %s9, 2
    // Predicated region
    $region21: #{tpu_custom_call.1} parent=5 // pred_check
      %p156 = pneg %p155
    $region22: #{tpu_custom_call.1} parent=5 // pred_check_branch
      %158 = sbr.rel (%p156) target = $region24
    $region23: #{tpu_custom_call.1} parent=5 // pred_region
      // Predicated region
      $region25: #{tpu_custom_call.1} parent=23 // pred_check
        %p159 = pneg %p41
      $region26: #{tpu_custom_call.1} parent=23 // pred_check_branch
        %161 = sbr.rel (%p159) target = $region28
      $region27: #{tpu_custom_call.1} parent=23 // pred_region
        %s162 = smul.u32 4, %s16
        %p163 = scmp.lt.s32.totalorder %s162, 7
        %s164 = scalar_select %p163, %s162, 7
        %s165 = smul.addr %s164, 18
        %s166 = smul.addr %s165, 4
        %s167 = scalar_lea.vmem %s0, %s166
        %s168 = smul.u32 4, %s16
      $region28: #{tpu_custom_call.1} parent=23 // pred_fallthru
        _
    $region24: #{tpu_custom_call.1} parent=5 // pred_fallthru
      _
    %p169 = scmp.le.s32.totalorder 1, %s9
    %p170 = scmp.lt.s32.totalorder %s9, 3
    %p171 = pnand %p169, %p170
    %p172 = pneg %p171
    // Predicated region
    $region29: #{tpu_custom_call.1} parent=5 // pred_check
      _
    $region30: #{tpu_custom_call.1} parent=5 // pred_check_branch
      %174 = sbr.rel (%p171) target = $region32
    $region31: #{tpu_custom_call.1} parent=5 // pred_region
      %s175 = ssub.s32 %s9, 1
      %s176 = smul.u32 4, %s18
      %p177 = scmp.lt.s32.totalorder %s176, 7
      %s178 = scalar_select %p177, %s176, 7
      %s179 = smul.addr %s178, 18
      %s180 = smul.addr %s179, 4
      %s181 = scalar_lea.vmem %s0, %s180
      %p182 = pneg %p47
      %p183 = pneg %p44
      %p184 = scmp.lt.s32.totalorder %s19, 0
      %s185 = scalar_select %p184, %s19, 0
      %s186 = smul.addr %s185, 2
      %s187 = scalar_lea.vmem %s1, %s186
      %p188 = pneg %p73
      %p189 = pneg %p70
      %p190 = scmp.lt.s32.totalorder %s19, 0
      %s191 = scalar_select %p190, %s19, 0
      %s192 = scalar_lea.vmem %s2, %s191
      %p193 = pneg %p99
      %p194 = pneg %p96
      %p195 = pneg %p127
      %p196 = pneg %p124
      %p197 = scmp.lt.s32.totalorder %s18, 1
      %s198 = scalar_select %p197, %s18, 1
      %p199 = scmp.lt.s32.totalorder %s19, 0
      %s200 = scalar_select %p199, %s19, 0
      %s201 = smul.addr %s198, 8
      %s202 = sadd.s32 %s200, %s201
      %s203 = smul.addr %s202, 4
      %s204 = scalar_lea.vmem %s3, %s203
      %s205 = smul.u32 4, %s18
      %p206 = scmp.lt.s32.totalorder %s205, 7
      %s207 = scalar_select %p206, %s205, 7
      %s208 = smul.addr %s207, 18
      %s209 = smul.addr %s208, 4
      %s210 = scalar_lea.vmem %s0, %s209
      %s211 = smul.u32 4, %s18
      %p212 = scmp.lt.s32.totalorder %s19, 0
      %s213 = scalar_select %p212, %s19, 0
      %s214 = smul.addr %s213, 2
      %s215 = scalar_lea.vmem %s1, %s214
      %p216 = scmp.lt.s32.totalorder %s19, 0
      %s217 = scalar_select %p216, %s19, 0
      %s218 = scalar_lea.vmem %s2, %s217
      %p219 = scmp.lt.s32.totalorder %s18, 1
      %s220 = scalar_select %p219, %s18, 1
      %p221 = scmp.lt.s32.totalorder %s19, 0
      %s222 = scalar_select %p221, %s19, 0
      %s223 = smul.addr %s220, 8
      %s224 = sadd.s32 %s222, %s223
      %s225 = smul.addr %s224, 4
      %s226 = scalar_lea.vmem %s3, %s225
      %v228 = vld [vmem:[%s210] sm:$0xf]
      %v229 = vld [vmem:[%s210 + $0x8] sm:$0xf]
      %v230 = vld [vmem:[%s210 + $0x10] sm:$0xf]
      %v231 = vld [vmem:[%s210 + $0x18] sm:$0xf]
      %v232 = vld [vmem:[%s210 + $0x20] sm:$0xf]
      %v233 = vld [vmem:[%s210 + $0x28] sm:$0xf]
      %v234 = vld [vmem:[%s210 + $0x30] sm:$0xf]
      %v235 = vld [vmem:[%s210 + $0x38] sm:$0xf]
      %v236 = vld [vmem:[%s215] sm:$0x3]
      %s237 = scalar_lea.vmem %s210, 72
      %v238 = vld [vmem:[%s237] sm:$0xf]
      %v239 = vld [vmem:[%s237 + $0x8] sm:$0xf]
      %v240 = vld [vmem:[%s237 + $0x10] sm:$0xf]
      %v241 = vld [vmem:[%s237 + $0x18] sm:$0xf]
      %v242 = vld [vmem:[%s237 + $0x20] sm:$0xf]
      %v243 = vld [vmem:[%s237 + $0x28] sm:$0xf]
      %v244 = vld [vmem:[%s237 + $0x30] sm:$0xf]
      %v245 = vld [vmem:[%s237 + $0x38] sm:$0xf]
      %s246 = scalar_lea.vmem %s215, 2
      %v247 = vld [vmem:[%s246] sm:$0x3]
      %v256 = vunpack.c.l.b16 %v238
      %v257 = vunpack.c.l.b16 %v239
      %v258 = vunpack.c.l.b16 %v240
      %v259 = vunpack.c.l.b16 %v241
      %v260 = vunpack.c.l.b16 %v242
      %v261 = vunpack.c.l.b16 %v243
      %v262 = vunpack.c.l.b16 %v244
      %v263 = vunpack.c.l.b16 %v245
      %v264 = vpack.c.b16 %v257, %v256
      %v265 = vpack.c.b16 %v259, %v258
      %v266 = vpack.c.b16 %v261, %v260
      %v267 = vpack.c.b16 %v263, %v262
      %vm268 = vcmask 31744
      %v270 = vsel %vm268, %v264, 0
      %v273 = vsel %vm268, %v265, 0
      %v276 = vsel %vm268, %v266, 0
      %v279 = vsel %vm268, %v267, 0
      %vm281 = vcmask 1041408
      %v283 = vsel %vm281, %v247, 0
      %285 = vmatprep.subr.bf16.mxu0 0
      %286 = vmatpush1.bf16.msra.mxu0 0
      %287 = vmatprep.subr.bf16.mxu0 0
      %288 = vmatpush1.bf16.msra.mxu0 0
      %289 = vmatprep.subr.bf16.mxu0 0
      %290 = vmatpush1.bf16.msra.mxu0 0
      %291 = vmatprep.subr.bf16.mxu0 0
      %292 = vmatpush1.bf16.msra.mxu0 0
      %293 = vmatprep.subr.bf16.mxu0 0
      %294 = vmatpush1.bf16.msra.mxu0 0
      %295 = vmatprep.subr.bf16.mxu0 0
      %296 = vmatpush1.bf16.msra.mxu0 0
      %297 = vmatprep.subr.bf16.mxu0 0
      %298 = vmatpush1.bf16.msra.mxu0 0
      %299 = vmatprep.subr.bf16.mxu0 0
      %300 = vmatpush1.bf16.msra.mxu0 %v283
      %301 = vmatprep.subr.bf16.mxu0 0
      %302 = vmatpush2.bf16.msra.mxu0 0
      %303 = vmatprep.subr.bf16.mxu0 0
      %304 = vmatpush2.bf16.msra.mxu0 0
      %305 = vmatprep.subr.bf16.mxu0 0
      %306 = vmatpush2.bf16.msra.mxu0 0
      %307 = vmatprep.subr.bf16.mxu0 0
      %308 = vmatpush2.bf16.msra.mxu0 0
      %309 = vmatprep.subr.bf16.mxu0 0
      %310 = vmatpush2.bf16.msra.mxu0 0
      %311 = vmatprep.subr.bf16.mxu0 0
      %312 = vmatpush2.bf16.msra.mxu0 0
      %313 = vmatprep.subr.bf16.mxu0 0
      %314 = vmatpush2.bf16.msra.mxu0 0
      %315 = vmatprep.subr.bf16.mxu0 0
      %316 = vmatpush2.bf16.msra.mxu0 0
      %317 = vmatprep.mubr.bf16.mxu0 0
      %318 = vmatmul.mubr.bf16.gmra.mxu0 %v270
      %v319 = vpop.f32.mrf.mxu0
      %v320 = vadd.f32 0.0, %v319
      %v321 = vpop.f32.mrf.mxu0
      %v322 = vpop.f32.mrf.mxu0
      %v323 = vadd.f32 0.0, %v322
      %v324 = vpop.f32.mrf.mxu0
      %325 = vmatprep.mubr.bf16.mxu0 0
      %326 = vmatmul.mubr.bf16.gmra.mxu0 %v273
      %v327 = vpop.f32.mrf.mxu0
      %v328 = vadd.f32 0.0, %v327
      %v329 = vpop.f32.mrf.mxu0
      %v330 = vpop.f32.mrf.mxu0
      %v331 = vadd.f32 0.0, %v330
      %v332 = vpop.f32.mrf.mxu0
      %333 = vmatprep.mubr.bf16.mxu0 0
      %334 = vmatmul.mubr.bf16.gmra.mxu0 %v276
      %v335 = vpop.f32.mrf.mxu0
      %v336 = vadd.f32 0.0, %v335
      %v337 = vpop.f32.mrf.mxu0
      %v338 = vpop.f32.mrf.mxu0
      %v339 = vadd.f32 0.0, %v338
      %v340 = vpop.f32.mrf.mxu0
      %341 = vmatprep.mubr.bf16.mxu0 0
      %342 = vmatmul.mubr.bf16.gmra.mxu0 %v279
      %v343 = vpop.f32.mrf.mxu0
      %v344 = vadd.f32 0.0, %v343
      %v345 = vpop.f32.mrf.mxu0
      %v346 = vpop.f32.mrf.mxu0
      %v347 = vadd.f32 0.0, %v346
      %v348 = vpop.f32.mrf.mxu0
      %349 = vdwg.mxu0
      %v358 = vunpack.c.l.b16 %v228
      %v359 = vunpack.c.l.b16 %v229
      %v360 = vunpack.c.l.b16 %v230
      %v361 = vunpack.c.l.b16 %v231
      %v362 = vunpack.c.l.b16 %v232
      %v363 = vunpack.c.l.b16 %v233
      %v364 = vunpack.c.l.b16 %v234
      %v365 = vunpack.c.l.b16 %v235
      %v366 = vpack.c.b16 %v359, %v358
      %v367 = vpack.c.b16 %v361, %v360
      %v368 = vpack.c.b16 %v363, %v362
      %v369 = vpack.c.b16 %v365, %v364
      %v371 = vsel %vm268, %v366, 0
      %v374 = vsel %vm268, %v367, 0
      %v377 = vsel %vm268, %v368, 0
      %v380 = vsel %vm268, %v369, 0
      %v383 = vsel %vm281, %v236, 0
      %385 = vmatprep.subr.bf16.mxu0 0
      %386 = vmatpush1.bf16.msra.mxu0 0
      %387 = vmatprep.subr.bf16.mxu0 0
      %388 = vmatpush1.bf16.msra.mxu0 0
      %389 = vmatprep.subr.bf16.mxu0 0
      %390 = vmatpush1.bf16.msra.mxu0 0
      %391 = vmatprep.subr.bf16.mxu0 0
      %392 = vmatpush1.bf16.msra.mxu0 0
      %393 = vmatprep.subr.bf16.mxu0 0
      %394 = vmatpush1.bf16.msra.mxu0 0
      %395 = vmatprep.subr.bf16.mxu0 0
      %396 = vmatpush1.bf16.msra.mxu0 0
      %397 = vmatprep.subr.bf16.mxu0 0
      %398 = vmatpush1.bf16.msra.mxu0 0
      %399 = vmatprep.subr.bf16.mxu0 0
      %400 = vmatpush1.bf16.msra.mxu0 %v383
      %401 = vmatprep.subr.bf16.mxu0 0
      %402 = vmatpush2.bf16.msra.mxu0 0
      %403 = vmatprep.subr.bf16.mxu0 0
      %404 = vmatpush2.bf16.msra.mxu0 0
      %405 = vmatprep.subr.bf16.mxu0 0
      %406 = vmatpush2.bf16.msra.mxu0 0
      %407 = vmatprep.subr.bf16.mxu0 0
      %408 = vmatpush2.bf16.msra.mxu0 0
      %409 = vmatprep.subr.bf16.mxu0 0
      %410 = vmatpush2.bf16.msra.mxu0 0
      %411 = vmatprep.subr.bf16.mxu0 0
      %412 = vmatpush2.bf16.msra.mxu0 0
      %413 = vmatprep.subr.bf16.mxu0 0
      %414 = vmatpush2.bf16.msra.mxu0 0
      %415 = vmatprep.subr.bf16.mxu0 0
      %416 = vmatpush2.bf16.msra.mxu0 0
      %417 = vmatprep.mubr.bf16.mxu0 0
      %418 = vmatmul.mubr.bf16.gmra.mxu0 %v371
      %v419 = vpop.f32.mrf.mxu0
      %v420 = vadd.f32 %v320, %v419
      %v421 = vpop.f32.mrf.mxu0
      %v422 = vpop.f32.mrf.mxu0
      %v423 = vadd.f32 %v323, %v422
      %v424 = vpop.f32.mrf.mxu0
      %425 = vmatprep.mubr.bf16.mxu0 0
      %426 = vmatmul.mubr.bf16.gmra.mxu0 %v374
      %v427 = vpop.f32.mrf.mxu0
      %v428 = vadd.f32 %v328, %v427
      %v429 = vpop.f32.mrf.mxu0
      %v430 = vpop.f32.mrf.mxu0
      %v431 = vadd.f32 %v331, %v430
      %v432 = vpop.f32.mrf.mxu0
      %433 = vmatprep.mubr.bf16.mxu0 0
      %434 = vmatmul.mubr.bf16.gmra.mxu0 %v377
      %v435 = vpop.f32.mrf.mxu0
      %v436 = vadd.f32 %v336, %v435
      %v437 = vpop.f32.mrf.mxu0
      %v438 = vpop.f32.mrf.mxu0
      %v439 = vadd.f32 %v339, %v438
      %v440 = vpop.f32.mrf.mxu0
      %441 = vmatprep.mubr.bf16.mxu0 0
      %442 = vmatmul.mubr.bf16.gmra.mxu0 %v380
      %v443 = vpop.f32.mrf.mxu0
      %v444 = vadd.f32 %v344, %v443
      %v445 = vpop.f32.mrf.mxu0
      %v446 = vpop.f32.mrf.mxu0
      %v447 = vadd.f32 %v347, %v446
      %v448 = vpop.f32.mrf.mxu0
      %449 = vdwg.mxu0
      %v450 = vld [vmem:[%s210] sm:$0xf]
      %v451 = vld [vmem:[%s210 + $0x4] sm:$0x1]
      %v452 = vld [vmem:[%s210 + $0x8] sm:$0xf]
      %v453 = vld [vmem:[%s210 + $0xc] sm:$0x1]
      %v454 = vld [vmem:[%s210 + $0x10] sm:$0xf]
      %v455 = vld [vmem:[%s210 + $0x14] sm:$0x1]
      %v456 = vld [vmem:[%s210 + $0x18] sm:$0xf]
      %v457 = vld [vmem:[%s210 + $0x1c] sm:$0x1]
      %v458 = vld [vmem:[%s210 + $0x20] sm:$0xf]
      %v459 = vld [vmem:[%s210 + $0x24] sm:$0x1]
      %v460 = vld [vmem:[%s210 + $0x28] sm:$0xf]
      %v461 = vld [vmem:[%s210 + $0x2c] sm:$0x1]
      %v462 = vld [vmem:[%s210 + $0x30] sm:$0xf]
      %v463 = vld [vmem:[%s210 + $0x34] sm:$0x1]
      %v464 = vld [vmem:[%s210 + $0x38] sm:$0xf]
      %v465 = vld [vmem:[%s210 + $0x3c] sm:$0x1]
      %vm466 = vsmask.f32 3328
      %vm467 = vsmask.f32 7440
      %vm468 = vmor %vm466, %vm467
      %v470 = vshrl.u32 %v450, 16
      %v472 = vrot.slane %v470, 4
      %v473 = vshll.u32 %v450, 16
      %v475 = vrot.slane %v473, 5
      %v476 = vor.u32 %v472, %v475
      %v477 = vrot.slane %v476, 4
      %v479 = vshll.u32 %v451, 16
      %v481 = vrot.slane %v479, 5
      %v482 = vsel %vm468, %v477, %v481
      %v484 = vshrl.u32 %v452, 16
      %v486 = vrot.slane %v484, 4
      %v487 = vshll.u32 %v452, 16
      %v489 = vrot.slane %v487, 5
      %v490 = vor.u32 %v486, %v489
      %v491 = vrot.slane %v490, 4
      %v493 = vshll.u32 %v453, 16
      %v495 = vrot.slane %v493, 5
      %v496 = vsel %vm468, %v491, %v495
      %v498 = vshrl.u32 %v454, 16
      %v500 = vrot.slane %v498, 4
      %v501 = vshll.u32 %v454, 16
      %v503 = vrot.slane %v501, 5
      %v504 = vor.u32 %v500, %v503
      %v505 = vrot.slane %v504, 4
      %v507 = vshll.u32 %v455, 16
      %v509 = vrot.slane %v507, 5
      %v510 = vsel %vm468, %v505, %v509
      %v512 = vshrl.u32 %v456, 16
      %v514 = vrot.slane %v512, 4
      %v515 = vshll.u32 %v456, 16
      %v517 = vrot.slane %v515, 5
      %v518 = vor.u32 %v514, %v517
      %v519 = vrot.slane %v518, 4
      %v521 = vshll.u32 %v457, 16
      %v523 = vrot.slane %v521, 5
      %v524 = vsel %vm468, %v519, %v523
      %v526 = vshrl.u32 %v458, 16
      %v528 = vrot.slane %v526, 4
      %v529 = vshll.u32 %v458, 16
      %v531 = vrot.slane %v529, 5
      %v532 = vor.u32 %v528, %v531
      %v533 = vrot.slane %v532, 4
      %v535 = vshll.u32 %v459, 16
      %v537 = vrot.slane %v535, 5
      %v538 = vsel %vm468, %v533, %v537
      %v540 = vshrl.u32 %v460, 16
      %v542 = vrot.slane %v540, 4
      %v543 = vshll.u32 %v460, 16
      %v545 = vrot.slane %v543, 5
      %v546 = vor.u32 %v542, %v545
      %v547 = vrot.slane %v546, 4
      %v549 = vshll.u32 %v461, 16
      %v551 = vrot.slane %v549, 5
      %v552 = vsel %vm468, %v547, %v551
      %v554 = vshrl.u32 %v462, 16
      %v556 = vrot.slane %v554, 4
      %v557 = vshll.u32 %v462, 16
      %v559 = vrot.slane %v557, 5
      %v560 = vor.u32 %v556, %v559
      %v561 = vrot.slane %v560, 4
      %v563 = vshll.u32 %v463, 16
      %v565 = vrot.slane %v563, 5
      %v566 = vsel %vm468, %v561, %v565
      %v568 = vshrl.u32 %v464, 16
      %v570 = vrot.slane %v568, 4
      %v571 = vshll.u32 %v464, 16
      %v573 = vrot.slane %v571, 5
      %v574 = vor.u32 %v570, %v573
      %v575 = vrot.slane %v574, 4
      %v577 = vshll.u32 %v465, 16
      %v579 = vrot.slane %v577, 5
      %v580 = vsel %vm468, %v575, %v579
      %s581 = scalar_lea.vmem %s215, 4
      %v582 = vld [vmem:[%s581] sm:$0x3]
      %v583 = vunpack.c.l.b16 %v482
      %v584 = vunpack.c.l.b16 %v496
      %v585 = vunpack.c.l.b16 %v510
      %v586 = vunpack.c.l.b16 %v524
      %v587 = vunpack.c.l.b16 %v538
      %v588 = vunpack.c.l.b16 %v552
      %v589 = vunpack.c.l.b16 %v566
      %v590 = vunpack.c.l.b16 %v580
      %v591 = vpack.c.b16 %v584, %v583
      %v592 = vpack.c.b16 %v586, %v585
      %v593 = vpack.c.b16 %v588, %v587
      %v594 = vpack.c.b16 %v590, %v589
      %v596 = vsel %vm268, %v591, 0
      %v599 = vsel %vm268, %v592, 0
      %v602 = vsel %vm268, %v593, 0
      %v605 = vsel %vm268, %v594, 0
      %v608 = vsel %vm281, %v582, 0
      %610 = vmatprep.subr.bf16.mxu0 0
      %611 = vmatpush1.bf16.msra.mxu0 0
      %612 = vmatprep.subr.bf16.mxu0 0
      %613 = vmatpush1.bf16.msra.mxu0 0
      %614 = vmatprep.subr.bf16.mxu0 0
      %615 = vmatpush1.bf16.msra.mxu0 0
      %616 = vmatprep.subr.bf16.mxu0 0
      %617 = vmatpush1.bf16.msra.mxu0 0
      %618 = vmatprep.subr.bf16.mxu0 0
      %619 = vmatpush1.bf16.msra.mxu0 0
      %620 = vmatprep.subr.bf16.mxu0 0
      %621 = vmatpush1.bf16.msra.mxu0 0
      %622 = vmatprep.subr.bf16.mxu0 0
      %623 = vmatpush1.bf16.msra.mxu0 0
      %624 = vmatprep.subr.bf16.mxu0 0
      %625 = vmatpush1.bf16.msra.mxu0 %v608
      %626 = vmatprep.subr.bf16.mxu0 0
      %627 = vmatpush2.bf16.msra.mxu0 0
      %628 = vmatprep.subr.bf16.mxu0 0
      %629 = vmatpush2.bf16.msra.mxu0 0
      %630 = vmatprep.subr.bf16.mxu0 0
      %631 = vmatpush2.bf16.msra.mxu0 0
      %632 = vmatprep.subr.bf16.mxu0 0
      %633 = vmatpush2.bf16.msra.mxu0 0
      %634 = vmatprep.subr.bf16.mxu0 0
      %635 = vmatpush2.bf16.msra.mxu0 0
      %636 = vmatprep.subr.bf16.mxu0 0
      %637 = vmatpush2.bf16.msra.mxu0 0
      %638 = vmatprep.subr.bf16.mxu0 0
      %639 = vmatpush2.bf16.msra.mxu0 0
      %640 = vmatprep.subr.bf16.mxu0 0
      %641 = vmatpush2.bf16.msra.mxu0 0
      %642 = vmatprep.mubr.bf16.mxu0 0
      %643 = vmatmul.mubr.bf16.gmra.mxu0 %v596
      %v644 = vpop.f32.mrf.mxu0
      %v645 = vadd.f32 0.0, %v644
      %v646 = vpop.f32.mrf.mxu0
      %v647 = vpop.f32.mrf.mxu0
      %v648 = vadd.f32 0.0, %v647
      %v649 = vpop.f32.mrf.mxu0
      %650 = vmatprep.mubr.bf16.mxu0 0
      %651 = vmatmul.mubr.bf16.gmra.mxu0 %v599
      %v652 = vpop.f32.mrf.mxu0
      %v653 = vadd.f32 0.0, %v652
      %v654 = vpop.f32.mrf.mxu0
      %v655 = vpop.f32.mrf.mxu0
      %v656 = vadd.f32 0.0, %v655
      %v657 = vpop.f32.mrf.mxu0
      %658 = vmatprep.mubr.bf16.mxu0 0
      %659 = vmatmul.mubr.bf16.gmra.mxu0 %v602
      %v660 = vpop.f32.mrf.mxu0
      %v661 = vadd.f32 0.0, %v660
      %v662 = vpop.f32.mrf.mxu0
      %v663 = vpop.f32.mrf.mxu0
      %v664 = vadd.f32 0.0, %v663
      %v665 = vpop.f32.mrf.mxu0
      %666 = vmatprep.mubr.bf16.mxu0 0
      %667 = vmatmul.mubr.bf16.gmra.mxu0 %v605
      %v668 = vpop.f32.mrf.mxu0
      %v669 = vadd.f32 0.0, %v668
      %v670 = vpop.f32.mrf.mxu0
      %v671 = vpop.f32.mrf.mxu0
      %v672 = vadd.f32 0.0, %v671
      %v673 = vpop.f32.mrf.mxu0
      %674 = vdwg.mxu0
      %v675 = vadd.f32 %v420, %v645
      %v676 = vadd.f32 %v423, %v648
      %v677 = vadd.f32 %v428, %v653
      %v678 = vadd.f32 %v431, %v656
      %v679 = vadd.f32 %v436, %v661
      %v680 = vadd.f32 %v439, %v664
      %v681 = vadd.f32 %v444, %v669
      %v682 = vadd.f32 %v447, %v672
      %s683 = scalar_lea.vmem %s210, 144
      %v684 = vld [vmem:[%s683] sm:$0xf]
      %v685 = vld [vmem:[%s683 + $0x8] sm:$0xf]
      %v686 = vld [vmem:[%s683 + $0x10] sm:$0xf]
      %v687 = vld [vmem:[%s683 + $0x18] sm:$0xf]
      %v688 = vld [vmem:[%s683 + $0x20] sm:$0xf]
      %v689 = vld [vmem:[%s683 + $0x28] sm:$0xf]
      %v690 = vld [vmem:[%s683 + $0x30] sm:$0xf]
      %v691 = vld [vmem:[%s683 + $0x38] sm:$0xf]
      %s692 = scalar_lea.vmem %s215, 6
      %v693 = vld [vmem:[%s692] sm:$0x3]
      %v702 = vunpack.c.l.b16 %v684
      %v703 = vunpack.c.l.b16 %v685
      %v704 = vunpack.c.l.b16 %v686
      %v705 = vunpack.c.l.b16 %v687
      %v706 = vunpack.c.l.b16 %v688
      %v707 = vunpack.c.l.b16 %v689
      %v708 = vunpack.c.l.b16 %v690
      %v709 = vunpack.c.l.b16 %v691
      %v710 = vpack.c.b16 %v703, %v702
      %v711 = vpack.c.b16 %v705, %v704
      %v712 = vpack.c.b16 %v707, %v706
      %v713 = vpack.c.b16 %v709, %v708
      %v715 = vsel %vm268, %v710, 0
      %v718 = vsel %vm268, %v711, 0
      %v721 = vsel %vm268, %v712, 0
      %v724 = vsel %vm268, %v713, 0
      %v727 = vsel %vm281, %v693, 0
      %729 = vmatprep.subr.bf16.mxu0 0
      %730 = vmatpush1.bf16.msra.mxu0 0
      %731 = vmatprep.subr.bf16.mxu0 0
      %732 = vmatpush1.bf16.msra.mxu0 0
      %733 = vmatprep.subr.bf16.mxu0 0
      %734 = vmatpush1.bf16.msra.mxu0 0
      %735 = vmatprep.subr.bf16.mxu0 0
      %736 = vmatpush1.bf16.msra.mxu0 0
      %737 = vmatprep.subr.bf16.mxu0 0
      %738 = vmatpush1.bf16.msra.mxu0 0
      %739 = vmatprep.subr.bf16.mxu0 0
      %740 = vmatpush1.bf16.msra.mxu0 0
      %741 = vmatprep.subr.bf16.mxu0 0
      %742 = vmatpush1.bf16.msra.mxu0 0
      %743 = vmatprep.subr.bf16.mxu0 0
      %744 = vmatpush1.bf16.msra.mxu0 %v727
      %745 = vmatprep.subr.bf16.mxu0 0
      %746 = vmatpush2.bf16.msra.mxu0 0
      %747 = vmatprep.subr.bf16.mxu0 0
      %748 = vmatpush2.bf16.msra.mxu0 0
      %749 = vmatprep.subr.bf16.mxu0 0
      %750 = vmatpush2.bf16.msra.mxu0 0
      %751 = vmatprep.subr.bf16.mxu0 0
      %752 = vmatpush2.bf16.msra.mxu0 0
      %753 = vmatprep.subr.bf16.mxu0 0
      %754 = vmatpush2.bf16.msra.mxu0 0
      %755 = vmatprep.subr.bf16.mxu0 0
      %756 = vmatpush2.bf16.msra.mxu0 0
      %757 = vmatprep.subr.bf16.mxu0 0
      %758 = vmatpush2.bf16.msra.mxu0 0
      %759 = vmatprep.subr.bf16.mxu0 0
      %760 = vmatpush2.bf16.msra.mxu0 0
      %761 = vmatprep.mubr.bf16.mxu0 0
      %762 = vmatmul.mubr.bf16.gmra.mxu0 %v715
      %v763 = vpop.f32.mrf.mxu0
      %v764 = vadd.f32 0.0, %v763
      %v765 = vpop.f32.mrf.mxu0
      %v766 = vpop.f32.mrf.mxu0
      %v767 = vadd.f32 0.0, %v766
      %v768 = vpop.f32.mrf.mxu0
      %769 = vmatprep.mubr.bf16.mxu0 0
      %770 = vmatmul.mubr.bf16.gmra.mxu0 %v718
      %v771 = vpop.f32.mrf.mxu0
      %v772 = vadd.f32 0.0, %v771
      %v773 = vpop.f32.mrf.mxu0
      %v774 = vpop.f32.mrf.mxu0
      %v775 = vadd.f32 0.0, %v774
      %v776 = vpop.f32.mrf.mxu0
      %777 = vmatprep.mubr.bf16.mxu0 0
      %778 = vmatmul.mubr.bf16.gmra.mxu0 %v721
      %v779 = vpop.f32.mrf.mxu0
      %v780 = vadd.f32 0.0, %v779
      %v781 = vpop.f32.mrf.mxu0
      %v782 = vpop.f32.mrf.mxu0
      %v783 = vadd.f32 0.0, %v782
      %v784 = vpop.f32.mrf.mxu0
      %785 = vmatprep.mubr.bf16.mxu0 0
      %786 = vmatmul.mubr.bf16.gmra.mxu0 %v724
      %v787 = vpop.f32.mrf.mxu0
      %v788 = vadd.f32 0.0, %v787
      %v789 = vpop.f32.mrf.mxu0
      %v790 = vpop.f32.mrf.mxu0
      %v791 = vadd.f32 0.0, %v790
      %v792 = vpop.f32.mrf.mxu0
      %793 = vdwg.mxu0
      %v794 = vadd.f32 %v675, %v764
      %v795 = vadd.f32 %v676, %v767
      %v796 = vadd.f32 %v677, %v772
      %v797 = vadd.f32 %v678, %v775
      %v798 = vadd.f32 %v679, %v780
      %v799 = vadd.f32 %v680, %v783
      %v800 = vadd.f32 %v681, %v788
      %v801 = vadd.f32 %v682, %v791
      %s802 = scalar_lea.vmem %s210, 216
      %v803 = vld [vmem:[%s802] sm:$0xf]
      %v804 = vld [vmem:[%s802 + $0x8] sm:$0xf]
      %v805 = vld [vmem:[%s802 + $0x10] sm:$0xf]
      %v806 = vld [vmem:[%s802 + $0x18] sm:$0xf]
      %v807 = vld [vmem:[%s802 + $0x20] sm:$0xf]
      %v808 = vld [vmem:[%s802 + $0x28] sm:$0xf]
      %v809 = vld [vmem:[%s802 + $0x30] sm:$0xf]
      %v810 = vld [vmem:[%s802 + $0x38] sm:$0xf]
      %s811 = scalar_lea.vmem %s215, 8
      %v812 = vld [vmem:[%s811] sm:$0x3]
      %v821 = vunpack.c.l.b16 %v803
      %v822 = vunpack.c.l.b16 %v804
      %v823 = vunpack.c.l.b16 %v805
      %v824 = vunpack.c.l.b16 %v806
      %v825 = vunpack.c.l.b16 %v807
      %v826 = vunpack.c.l.b16 %v808
      %v827 = vunpack.c.l.b16 %v809
      %v828 = vunpack.c.l.b16 %v810
      %v829 = vpack.c.b16 %v822, %v821
      %v830 = vpack.c.b16 %v824, %v823
      %v831 = vpack.c.b16 %v826, %v825
      %v832 = vpack.c.b16 %v828, %v827
      %v834 = vsel %vm268, %v829, 0
      %v837 = vsel %vm268, %v830, 0
      %v840 = vsel %vm268, %v831, 0
      %v843 = vsel %vm268, %v832, 0
      %v846 = vsel %vm281, %v812, 0
      %848 = vmatprep.subr.bf16.mxu0 0
      %849 = vmatpush1.bf16.msra.mxu0 0
      %850 = vmatprep.subr.bf16.mxu0 0
      %851 = vmatpush1.bf16.msra.mxu0 0
      %852 = vmatprep.subr.bf16.mxu0 0
      %853 = vmatpush1.bf16.msra.mxu0 0
      %854 = vmatprep.subr.bf16.mxu0 0
      %855 = vmatpush1.bf16.msra.mxu0 0
      %856 = vmatprep.subr.bf16.mxu0 0
      %857 = vmatpush1.bf16.msra.mxu0 0
      %858 = vmatprep.subr.bf16.mxu0 0
      %859 = vmatpush1.bf16.msra.mxu0 0
      %860 = vmatprep.subr.bf16.mxu0 0
      %861 = vmatpush1.bf16.msra.mxu0 0
      %862 = vmatprep.subr.bf16.mxu0 0
      %863 = vmatpush1.bf16.msra.mxu0 %v846
      %864 = vmatprep.subr.bf16.mxu0 0
      %865 = vmatpush2.bf16.msra.mxu0 0
      %866 = vmatprep.subr.bf16.mxu0 0
      %867 = vmatpush2.bf16.msra.mxu0 0
      %868 = vmatprep.subr.bf16.mxu0 0
      %869 = vmatpush2.bf16.msra.mxu0 0
      %870 = vmatprep.subr.bf16.mxu0 0
      %871 = vmatpush2.bf16.msra.mxu0 0
      %872 = vmatprep.subr.bf16.mxu0 0
      %873 = vmatpush2.bf16.msra.mxu0 0
      %874 = vmatprep.subr.bf16.mxu0 0
      %875 = vmatpush2.bf16.msra.mxu0 0
      %876 = vmatprep.subr.bf16.mxu0 0
      %877 = vmatpush2.bf16.msra.mxu0 0
      %878 = vmatprep.subr.bf16.mxu0 0
      %879 = vmatpush2.bf16.msra.mxu0 0
      %880 = vmatprep.mubr.bf16.mxu0 0
      %881 = vmatmul.mubr.bf16.gmra.mxu0 %v834
      %v882 = vpop.f32.mrf.mxu0
      %v883 = vadd.f32 0.0, %v882
      %v884 = vpop.f32.mrf.mxu0
      %v885 = vpop.f32.mrf.mxu0
      %v886 = vadd.f32 0.0, %v885
      %v887 = vpop.f32.mrf.mxu0
      %888 = vmatprep.mubr.bf16.mxu0 0
      %889 = vmatmul.mubr.bf16.gmra.mxu0 %v837
      %v890 = vpop.f32.mrf.mxu0
      %v891 = vadd.f32 0.0, %v890
      %v892 = vpop.f32.mrf.mxu0
      %v893 = vpop.f32.mrf.mxu0
      %v894 = vadd.f32 0.0, %v893
      %v895 = vpop.f32.mrf.mxu0
      %896 = vmatprep.mubr.bf16.mxu0 0
      %897 = vmatmul.mubr.bf16.gmra.mxu0 %v840
      %v898 = vpop.f32.mrf.mxu0
      %v899 = vadd.f32 0.0, %v898
      %v900 = vpop.f32.mrf.mxu0
      %v901 = vpop.f32.mrf.mxu0
      %v902 = vadd.f32 0.0, %v901
      %v903 = vpop.f32.mrf.mxu0
      %904 = vmatprep.mubr.bf16.mxu0 0
      %905 = vmatmul.mubr.bf16.gmra.mxu0 %v843
      %v906 = vpop.f32.mrf.mxu0
      %v907 = vadd.f32 0.0, %v906
      %v908 = vpop.f32.mrf.mxu0
      %v909 = vpop.f32.mrf.mxu0
      %v910 = vadd.f32 0.0, %v909
      %v911 = vpop.f32.mrf.mxu0
      %912 = vdwg.mxu0
      %v913 = vadd.f32 %v794, %v883
      %v914 = vadd.f32 %v795, %v886
      %v915 = vadd.f32 %v796, %v891
      %v916 = vadd.f32 %v797, %v894
      %v917 = vadd.f32 %v798, %v899
      %v918 = vadd.f32 %v799, %v902
      %v919 = vadd.f32 %v800, %v907
      %v920 = vadd.f32 %v801, %v910
      %v921 = vld [vmem:[%s683] sm:$0xf]
      %v922 = vld [vmem:[%s683 + $0x4] sm:$0x1]
      %v923 = vld [vmem:[%s683 + $0x8] sm:$0xf]
      %v924 = vld [vmem:[%s683 + $0xc] sm:$0x1]
      %v925 = vld [vmem:[%s683 + $0x10] sm:$0xf]
      %v926 = vld [vmem:[%s683 + $0x14] sm:$0x1]
      %v927 = vld [vmem:[%s683 + $0x18] sm:$0xf]
      %v928 = vld [vmem:[%s683 + $0x1c] sm:$0x1]
      %v929 = vld [vmem:[%s683 + $0x20] sm:$0xf]
      %v930 = vld [vmem:[%s683 + $0x24] sm:$0x1]
      %v931 = vld [vmem:[%s683 + $0x28] sm:$0xf]
      %v932 = vld [vmem:[%s683 + $0x2c] sm:$0x1]
      %v933 = vld [vmem:[%s683 + $0x30] sm:$0xf]
      %v934 = vld [vmem:[%s683 + $0x34] sm:$0x1]
      %v935 = vld [vmem:[%s683 + $0x38] sm:$0xf]
      %v936 = vld [vmem:[%s683 + $0x3c] sm:$0x1]
      %v938 = vshrl.u32 %v921, 16
      %v940 = vrot.slane %v938, 4
      %v941 = vshll.u32 %v921, 16
      %v943 = vrot.slane %v941, 5
      %v944 = vor.u32 %v940, %v943
      %v945 = vrot.slane %v944, 4
      %v947 = vshll.u32 %v922, 16
      %v949 = vrot.slane %v947, 5
      %v950 = vsel %vm468, %v945, %v949
      %v952 = vshrl.u32 %v923, 16
      %v954 = vrot.slane %v952, 4
      %v955 = vshll.u32 %v923, 16
      %v957 = vrot.slane %v955, 5
      %v958 = vor.u32 %v954, %v957
      %v959 = vrot.slane %v958, 4
      %v961 = vshll.u32 %v924, 16
      %v963 = vrot.slane %v961, 5
      %v964 = vsel %vm468, %v959, %v963
      %v966 = vshrl.u32 %v925, 16
      %v968 = vrot.slane %v966, 4
      %v969 = vshll.u32 %v925, 16
      %v971 = vrot.slane %v969, 5
      %v972 = vor.u32 %v968, %v971
      %v973 = vrot.slane %v972, 4
      %v975 = vshll.u32 %v926, 16
      %v977 = vrot.slane %v975, 5
      %v978 = vsel %vm468, %v973, %v977
      %v980 = vshrl.u32 %v927, 16
      %v982 = vrot.slane %v980, 4
      %v983 = vshll.u32 %v927, 16
      %v985 = vrot.slane %v983, 5
      %v986 = vor.u32 %v982, %v985
      %v987 = vrot.slane %v986, 4
      %v989 = vshll.u32 %v928, 16
      %v991 = vrot.slane %v989, 5
      %v992 = vsel %vm468, %v987, %v991
      %v994 = vshrl.u32 %v929, 16
      %v996 = vrot.slane %v994, 4
      %v997 = vshll.u32 %v929, 16
      %v999 = vrot.slane %v997, 5
      %v1000 = vor.u32 %v996, %v999
      %v1001 = vrot.slane %v1000, 4
      %v1003 = vshll.u32 %v930, 16
      %v1005 = vrot.slane %v1003, 5
      %v1006 = vsel %vm468, %v1001, %v1005
      %v1008 = vshrl.u32 %v931, 16
      %v1010 = vrot.slane %v1008, 4
      %v1011 = vshll.u32 %v931, 16
      %v1013 = vrot.slane %v1011, 5
      %v1014 = vor.u32 %v1010, %v1013
      %v1015 = vrot.slane %v1014, 4
      %v1017 = vshll.u32 %v932, 16
      %v1019 = vrot.slane %v1017, 5
      %v1020 = vsel %vm468, %v1015, %v1019
      %v1022 = vshrl.u32 %v933, 16
      %v1024 = vrot.slane %v1022, 4
      %v1025 = vshll.u32 %v933, 16
      %v1027 = vrot.slane %v1025, 5
      %v1028 = vor.u32 %v1024, %v1027
      %v1029 = vrot.slane %v1028, 4
      %v1031 = vshll.u32 %v934, 16
      %v1033 = vrot.slane %v1031, 5
      %v1034 = vsel %vm468, %v1029, %v1033
      %v1036 = vshrl.u32 %v935, 16
      %v1038 = vrot.slane %v1036, 4
      %v1039 = vshll.u32 %v935, 16
      %v1041 = vrot.slane %v1039, 5
      %v1042 = vor.u32 %v1038, %v1041
      %v1043 = vrot.slane %v1042, 4
      %v1045 = vshll.u32 %v936, 16
      %v1047 = vrot.slane %v1045, 5
      %v1048 = vsel %vm468, %v1043, %v1047
      %s1049 = scalar_lea.vmem %s215, 10
      %v1050 = vld [vmem:[%s1049] sm:$0x3]
      %v1051 = vunpack.c.l.b16 %v950
      %v1052 = vunpack.c.l.b16 %v964
      %v1053 = vunpack.c.l.b16 %v978
      %v1054 = vunpack.c.l.b16 %v992
      %v1055 = vunpack.c.l.b16 %v1006
      %v1056 = vunpack.c.l.b16 %v1020
      %v1057 = vunpack.c.l.b16 %v1034
      %v1058 = vunpack.c.l.b16 %v1048
      %v1059 = vpack.c.b16 %v1052, %v1051
      %v1060 = vpack.c.b16 %v1054, %v1053
      %v1061 = vpack.c.b16 %v1056, %v1055
      %v1062 = vpack.c.b16 %v1058, %v1057
      %v1064 = vsel %vm268, %v1059, 0
      %v1067 = vsel %vm268, %v1060, 0
      %v1070 = vsel %vm268, %v1061, 0
      %v1073 = vsel %vm268, %v1062, 0
      %v1076 = vsel %vm281, %v1050, 0
      %1078 = vmatprep.subr.bf16.mxu0 0
      %1079 = vmatpush1.bf16.msra.mxu0 0
      %1080 = vmatprep.subr.bf16.mxu0 0
      %1081 = vmatpush1.bf16.msra.mxu0 0
      %1082 = vmatprep.subr.bf16.mxu0 0
      %1083 = vmatpush1.bf16.msra.mxu0 0
      %1084 = vmatprep.subr.bf16.mxu0 0
      %1085 = vmatpush1.bf16.msra.mxu0 0
      %1086 = vmatprep.subr.bf16.mxu0 0
      %1087 = vmatpush1.bf16.msra.mxu0 0
      %1088 = vmatprep.subr.bf16.mxu0 0
      %1089 = vmatpush1.bf16.msra.mxu0 0
      %1090 = vmatprep.subr.bf16.mxu0 0
      %1091 = vmatpush1.bf16.msra.mxu0 0
      %1092 = vmatprep.subr.bf16.mxu0 0
      %1093 = vmatpush1.bf16.msra.mxu0 %v1076
      %1094 = vmatprep.subr.bf16.mxu0 0
      %1095 = vmatpush2.bf16.msra.mxu0 0
      %1096 = vmatprep.subr.bf16.mxu0 0
      %1097 = vmatpush2.bf16.msra.mxu0 0
      %1098 = vmatprep.subr.bf16.mxu0 0
      %1099 = vmatpush2.bf16.msra.mxu0 0
      %1100 = vmatprep.subr.bf16.mxu0 0
      %1101 = vmatpush2.bf16.msra.mxu0 0
      %1102 = vmatprep.subr.bf16.mxu0 0
      %1103 = vmatpush2.bf16.msra.mxu0 0
      %1104 = vmatprep.subr.bf16.mxu0 0
      %1105 = vmatpush2.bf16.msra.mxu0 0
      %1106 = vmatprep.subr.bf16.mxu0 0
      %1107 = vmatpush2.bf16.msra.mxu0 0
      %1108 = vmatprep.subr.bf16.mxu0 0
      %1109 = vmatpush2.bf16.msra.mxu0 0
      %1110 = vmatprep.mubr.bf16.mxu0 0
      %1111 = vmatmul.mubr.bf16.gmra.mxu0 %v1064
      %v1112 = vpop.f32.mrf.mxu0
      %v1113 = vadd.f32 0.0, %v1112
      %v1114 = vpop.f32.mrf.mxu0
      %v1115 = vpop.f32.mrf.mxu0
      %v1116 = vadd.f32 0.0, %v1115
      %v1117 = vpop.f32.mrf.mxu0
      %1118 = vmatprep.mubr.bf16.mxu0 0
      %1119 = vmatmul.mubr.bf16.gmra.mxu0 %v1067
      %v1120 = vpop.f32.mrf.mxu0
      %v1121 = vadd.f32 0.0, %v1120
      %v1122 = vpop.f32.mrf.mxu0
      %v1123 = vpop.f32.mrf.mxu0
      %v1124 = vadd.f32 0.0, %v1123
      %v1125 = vpop.f32.mrf.mxu0
      %1126 = vmatprep.mubr.bf16.mxu0 0
      %1127 = vmatmul.mubr.bf16.gmra.mxu0 %v1070
      %v1128 = vpop.f32.mrf.mxu0
      %v1129 = vadd.f32 0.0, %v1128
      %v1130 = vpop.f32.mrf.mxu0
      %v1131 = vpop.f32.mrf.mxu0
      %v1132 = vadd.f32 0.0, %v1131
      %v1133 = vpop.f32.mrf.mxu0
      %1134 = vmatprep.mubr.bf16.mxu0 0
      %1135 = vmatmul.mubr.bf16.gmra.mxu0 %v1073
      %v1136 = vpop.f32.mrf.mxu0
      %v1137 = vadd.f32 0.0, %v1136
      %v1138 = vpop.f32.mrf.mxu0
      %v1139 = vpop.f32.mrf.mxu0
      %v1140 = vadd.f32 0.0, %v1139
      %v1141 = vpop.f32.mrf.mxu0
      %1142 = vdwg.mxu0
      %v1143 = vadd.f32 %v913, %v1113
      %v1144 = vadd.f32 %v914, %v1116
      %v1145 = vadd.f32 %v915, %v1121
      %v1146 = vadd.f32 %v916, %v1124
      %v1147 = vadd.f32 %v917, %v1129
      %v1148 = vadd.f32 %v918, %v1132
      %v1149 = vadd.f32 %v919, %v1137
      %v1150 = vadd.f32 %v920, %v1140
      %s1151 = scalar_lea.vmem %s210, 8
      %v1152 = vld [vmem:[%s1151] sm:$0xf]
      %v1153 = vld [vmem:[%s1151 + $0x8] sm:$0xf]
      %v1154 = vld [vmem:[%s1151 + $0x10] sm:$0xf]
      %v1155 = vld [vmem:[%s1151 + $0x18] sm:$0xf]
      %v1156 = vld [vmem:[%s1151 + $0x20] sm:$0xf]
      %v1157 = vld [vmem:[%s1151 + $0x28] sm:$0xf]
      %v1158 = vld [vmem:[%s1151 + $0x30] sm:$0xf]
      %v1159 = vld [vmem:[%s1151 + $0x38] sm:$0xf]
      %s1160 = scalar_lea.vmem %s215, 12
      %v1161 = vld [vmem:[%s1160] sm:$0x3]
      %v1170 = vunpack.c.l.b16 %v1152
      %v1171 = vunpack.c.l.b16 %v1153
      %v1172 = vunpack.c.l.b16 %v1154
      %v1173 = vunpack.c.l.b16 %v1155
      %v1174 = vunpack.c.l.b16 %v1156
      %v1175 = vunpack.c.l.b16 %v1157
      %v1176 = vunpack.c.l.b16 %v1158
      %v1177 = vunpack.c.l.b16 %v1159
      %v1178 = vpack.c.b16 %v1171, %v1170
      %v1179 = vpack.c.b16 %v1173, %v1172
      %v1180 = vpack.c.b16 %v1175, %v1174
      %v1181 = vpack.c.b16 %v1177, %v1176
      %v1183 = vsel %vm268, %v1178, 0
      %v1186 = vsel %vm268, %v1179, 0
      %v1189 = vsel %vm268, %v1180, 0
      %v1192 = vsel %vm268, %v1181, 0
      %v1195 = vsel %vm281, %v1161, 0
      %1197 = vmatprep.subr.bf16.mxu0 0
      %1198 = vmatpush1.bf16.msra.mxu0 0
      %1199 = vmatprep.subr.bf16.mxu0 0
      %1200 = vmatpush1.bf16.msra.mxu0 0
      %1201 = vmatprep.subr.bf16.mxu0 0
      %1202 = vmatpush1.bf16.msra.mxu0 0
      %1203 = vmatprep.subr.bf16.mxu0 0
      %1204 = vmatpush1.bf16.msra.mxu0 0
      %1205 = vmatprep.subr.bf16.mxu0 0
      %1206 = vmatpush1.bf16.msra.mxu0 0
      %1207 = vmatprep.subr.bf16.mxu0 0
      %1208 = vmatpush1.bf16.msra.mxu0 0
      %1209 = vmatprep.subr.bf16.mxu0 0
      %1210 = vmatpush1.bf16.msra.mxu0 0
      %1211 = vmatprep.subr.bf16.mxu0 0
      %1212 = vmatpush1.bf16.msra.mxu0 %v1195
      %1213 = vmatprep.subr.bf16.mxu0 0
      %1214 = vmatpush2.bf16.msra.mxu0 0
      %1215 = vmatprep.subr.bf16.mxu0 0
      %1216 = vmatpush2.bf16.msra.mxu0 0
      %1217 = vmatprep.subr.bf16.mxu0 0
      %1218 = vmatpush2.bf16.msra.mxu0 0
      %1219 = vmatprep.subr.bf16.mxu0 0
      %1220 = vmatpush2.bf16.msra.mxu0 0
      %1221 = vmatprep.subr.bf16.mxu0 0
      %1222 = vmatpush2.bf16.msra.mxu0 0
      %1223 = vmatprep.subr.bf16.mxu0 0
      %1224 = vmatpush2.bf16.msra.mxu0 0
      %1225 = vmatprep.subr.bf16.mxu0 0
      %1226 = vmatpush2.bf16.msra.mxu0 0
      %1227 = vmatprep.subr.bf16.mxu0 0
      %1228 = vmatpush2.bf16.msra.mxu0 0
      %1229 = vmatprep.mubr.bf16.mxu0 0
      %1230 = vmatmul.mubr.bf16.gmra.mxu0 %v1183
      %v1231 = vpop.f32.mrf.mxu0
      %v1232 = vadd.f32 0.0, %v1231
      %v1233 = vpop.f32.mrf.mxu0
      %v1234 = vpop.f32.mrf.mxu0
      %v1235 = vadd.f32 0.0, %v1234
      %v1236 = vpop.f32.mrf.mxu0
      %1237 = vmatprep.mubr.bf16.mxu0 0
      %1238 = vmatmul.mubr.bf16.gmra.mxu0 %v1186
      %v1239 = vpop.f32.mrf.mxu0
      %v1240 = vadd.f32 0.0, %v1239
      %v1241 = vpop.f32.mrf.mxu0
      %v1242 = vpop.f32.mrf.mxu0
      %v1243 = vadd.f32 0.0, %v1242
      %v1244 = vpop.f32.mrf.mxu0
      %1245 = vmatprep.mubr.bf16.mxu0 0
      %1246 = vmatmul.mubr.bf16.gmra.mxu0 %v1189
      %v1247 = vpop.f32.mrf.mxu0
      %v1248 = vadd.f32 0.0, %v1247
      %v1249 = vpop.f32.mrf.mxu0
      %v1250 = vpop.f32.mrf.mxu0
      %v1251 = vadd.f32 0.0, %v1250
      %v1252 = vpop.f32.mrf.mxu0
      %1253 = vmatprep.mubr.bf16.mxu0 0
      %1254 = vmatmul.mubr.bf16.gmra.mxu0 %v1192
      %v1255 = vpop.f32.mrf.mxu0
      %v1256 = vadd.f32 0.0, %v1255
      %v1257 = vpop.f32.mrf.mxu0
      %v1258 = vpop.f32.mrf.mxu0
      %v1259 = vadd.f32 0.0, %v1258
      %v1260 = vpop.f32.mrf.mxu0
      %1261 = vdwg.mxu0
      %v1262 = vadd.f32 %v1143, %v1232
      %v1263 = vadd.f32 %v1144, %v1235
      %v1264 = vadd.f32 %v1145, %v1240
      %v1265 = vadd.f32 %v1146, %v1243
      %v1266 = vadd.f32 %v1147, %v1248
      %v1267 = vadd.f32 %v1148, %v1251
      %v1268 = vadd.f32 %v1149, %v1256
      %v1269 = vadd.f32 %v1150, %v1259
      %s1270 = scalar_lea.vmem %s210, 80
      %v1271 = vld [vmem:[%s1270] sm:$0xf]
      %v1272 = vld [vmem:[%s1270 + $0x8] sm:$0xf]
      %v1273 = vld [vmem:[%s1270 + $0x10] sm:$0xf]
      %v1274 = vld [vmem:[%s1270 + $0x18] sm:$0xf]
      %v1275 = vld [vmem:[%s1270 + $0x20] sm:$0xf]
      %v1276 = vld [vmem:[%s1270 + $0x28] sm:$0xf]
      %v1277 = vld [vmem:[%s1270 + $0x30] sm:$0xf]
      %v1278 = vld [vmem:[%s1270 + $0x38] sm:$0xf]
      %s1279 = scalar_lea.vmem %s215, 14
      %v1280 = vld [vmem:[%s1279] sm:$0x3]
      %v1289 = vunpack.c.l.b16 %v1271
      %v1290 = vunpack.c.l.b16 %v1272
      %v1291 = vunpack.c.l.b16 %v1273
      %v1292 = vunpack.c.l.b16 %v1274
      %v1293 = vunpack.c.l.b16 %v1275
      %v1294 = vunpack.c.l.b16 %v1276
      %v1295 = vunpack.c.l.b16 %v1277
      %v1296 = vunpack.c.l.b16 %v1278
      %v1297 = vpack.c.b16 %v1290, %v1289
      %v1298 = vpack.c.b16 %v1292, %v1291
      %v1299 = vpack.c.b16 %v1294, %v1293
      %v1300 = vpack.c.b16 %v1296, %v1295
      %v1302 = vsel %vm268, %v1297, 0
      %v1305 = vsel %vm268, %v1298, 0
      %v1308 = vsel %vm268, %v1299, 0
      %v1311 = vsel %vm268, %v1300, 0
      %v1314 = vsel %vm281, %v1280, 0
      %1316 = vmatprep.subr.bf16.mxu0 0
      %1317 = vmatpush1.bf16.msra.mxu0 0
      %1318 = vmatprep.subr.bf16.mxu0 0
      %1319 = vmatpush1.bf16.msra.mxu0 0
      %1320 = vmatprep.subr.bf16.mxu0 0
      %1321 = vmatpush1.bf16.msra.mxu0 0
      %1322 = vmatprep.subr.bf16.mxu0 0
      %1323 = vmatpush1.bf16.msra.mxu0 0
      %1324 = vmatprep.subr.bf16.mxu0 0
      %1325 = vmatpush1.bf16.msra.mxu0 0
      %1326 = vmatprep.subr.bf16.mxu0 0
      %1327 = vmatpush1.bf16.msra.mxu0 0
      %1328 = vmatprep.subr.bf16.mxu0 0
      %1329 = vmatpush1.bf16.msra.mxu0 0
      %1330 = vmatprep.subr.bf16.mxu0 0
      %1331 = vmatpush1.bf16.msra.mxu0 %v1314
      %1332 = vmatprep.subr.bf16.mxu0 0
      %1333 = vmatpush2.bf16.msra.mxu0 0
      %1334 = vmatprep.subr.bf16.mxu0 0
      %1335 = vmatpush2.bf16.msra.mxu0 0
      %1336 = vmatprep.subr.bf16.mxu0 0
      %1337 = vmatpush2.bf16.msra.mxu0 0
      %1338 = vmatprep.subr.bf16.mxu0 0
      %1339 = vmatpush2.bf16.msra.mxu0 0
      %1340 = vmatprep.subr.bf16.mxu0 0
      %1341 = vmatpush2.bf16.msra.mxu0 0
      %1342 = vmatprep.subr.bf16.mxu0 0
      %1343 = vmatpush2.bf16.msra.mxu0 0
      %1344 = vmatprep.subr.bf16.mxu0 0
      %1345 = vmatpush2.bf16.msra.mxu0 0
      %1346 = vmatprep.subr.bf16.mxu0 0
      %1347 = vmatpush2.bf16.msra.mxu0 0
      %1348 = vmatprep.mubr.bf16.mxu0 0
      %1349 = vmatmul.mubr.bf16.gmra.mxu0 %v1302
      %v1350 = vpop.f32.mrf.mxu0
      %v1351 = vadd.f32 0.0, %v1350
      %v1352 = vpop.f32.mrf.mxu0
      %v1353 = vpop.f32.mrf.mxu0
      %v1354 = vadd.f32 0.0, %v1353
      %v1355 = vpop.f32.mrf.mxu0
      %1356 = vmatprep.mubr.bf16.mxu0 0
      %1357 = vmatmul.mubr.bf16.gmra.mxu0 %v1305
      %v1358 = vpop.f32.mrf.mxu0
      %v1359 = vadd.f32 0.0, %v1358
      %v1360 = vpop.f32.mrf.mxu0
      %v1361 = vpop.f32.mrf.mxu0
      %v1362 = vadd.f32 0.0, %v1361
      %v1363 = vpop.f32.mrf.mxu0
      %1364 = vmatprep.mubr.bf16.mxu0 0
      %1365 = vmatmul.mubr.bf16.gmra.mxu0 %v1308
      %v1366 = vpop.f32.mrf.mxu0
      %v1367 = vadd.f32 0.0, %v1366
      %v1368 = vpop.f32.mrf.mxu0
      %v1369 = vpop.f32.mrf.mxu0
      %v1370 = vadd.f32 0.0, %v1369
      %v1371 = vpop.f32.mrf.mxu0
      %1372 = vmatprep.mubr.bf16.mxu0 0
      %1373 = vmatmul.mubr.bf16.gmra.mxu0 %v1311
      %v1374 = vpop.f32.mrf.mxu0
      %v1375 = vadd.f32 0.0, %v1374
      %v1376 = vpop.f32.mrf.mxu0
      %v1377 = vpop.f32.mrf.mxu0
      %v1378 = vadd.f32 0.0, %v1377
      %v1379 = vpop.f32.mrf.mxu0
      %1380 = vdwg.mxu0
      %v1381 = vadd.f32 %v1262, %v1351
      %v1382 = vadd.f32 %v1263, %v1354
      %v1383 = vadd.f32 %v1264, %v1359
      %v1384 = vadd.f32 %v1265, %v1362
      %v1385 = vadd.f32 %v1266, %v1367
      %v1386 = vadd.f32 %v1267, %v1370
      %v1387 = vadd.f32 %v1268, %v1375
      %v1388 = vadd.f32 %v1269, %v1378
      %v1389 = vld [vmem:[%s1151] sm:$0xf]
      %v1390 = vld [vmem:[%s1151 + $0x4] sm:$0x1]
      %v1391 = vld [vmem:[%s1151 + $0x8] sm:$0xf]
      %v1392 = vld [vmem:[%s1151 + $0xc] sm:$0x1]
      %v1393 = vld [vmem:[%s1151 + $0x10] sm:$0xf]
      %v1394 = vld [vmem:[%s1151 + $0x14] sm:$0x1]
      %v1395 = vld [vmem:[%s1151 + $0x18] sm:$0xf]
      %v1396 = vld [vmem:[%s1151 + $0x1c] sm:$0x1]
      %v1397 = vld [vmem:[%s1151 + $0x20] sm:$0xf]
      %v1398 = vld [vmem:[%s1151 + $0x24] sm:$0x1]
      %v1399 = vld [vmem:[%s1151 + $0x28] sm:$0xf]
      %v1400 = vld [vmem:[%s1151 + $0x2c] sm:$0x1]
      %v1401 = vld [vmem:[%s1151 + $0x30] sm:$0xf]
      %v1402 = vld [vmem:[%s1151 + $0x34] sm:$0x1]
      %v1403 = vld [vmem:[%s1151 + $0x38] sm:$0xf]
      %v1404 = vld [vmem:[%s1151 + $0x3c] sm:$0x1]
      %v1406 = vshrl.u32 %v1389, 16
      %v1408 = vrot.slane %v1406, 4
      %v1409 = vshll.u32 %v1389, 16
      %v1411 = vrot.slane %v1409, 5
      %v1412 = vor.u32 %v1408, %v1411
      %v1413 = vrot.slane %v1412, 4
      %v1415 = vshll.u32 %v1390, 16
      %v1417 = vrot.slane %v1415, 5
      %v1418 = vsel %vm468, %v1413, %v1417
      %v1420 = vshrl.u32 %v1391, 16
      %v1422 = vrot.slane %v1420, 4
      %v1423 = vshll.u32 %v1391, 16
      %v1425 = vrot.slane %v1423, 5
      %v1426 = vor.u32 %v1422, %v1425
      %v1427 = vrot.slane %v1426, 4
      %v1429 = vshll.u32 %v1392, 16
      %v1431 = vrot.slane %v1429, 5
      %v1432 = vsel %vm468, %v1427, %v1431
      %v1434 = vshrl.u32 %v1393, 16
      %v1436 = vrot.slane %v1434, 4
      %v1437 = vshll.u32 %v1393, 16
      %v1439 = vrot.slane %v1437, 5
      %v1440 = vor.u32 %v1436, %v1439
      %v1441 = vrot.slane %v1440, 4
      %v1443 = vshll.u32 %v1394, 16
      %v1445 = vrot.slane %v1443, 5
      %v1446 = vsel %vm468, %v1441, %v1445
      %v1448 = vshrl.u32 %v1395, 16
      %v1450 = vrot.slane %v1448, 4
      %v1451 = vshll.u32 %v1395, 16
      %v1453 = vrot.slane %v1451, 5
      %v1454 = vor.u32 %v1450, %v1453
      %v1455 = vrot.slane %v1454, 4
      %v1457 = vshll.u32 %v1396, 16
      %v1459 = vrot.slane %v1457, 5
      %v1460 = vsel %vm468, %v1455, %v1459
      %v1462 = vshrl.u32 %v1397, 16
      %v1464 = vrot.slane %v1462, 4
      %v1465 = vshll.u32 %v1397, 16
      %v1467 = vrot.slane %v1465, 5
      %v1468 = vor.u32 %v1464, %v1467
      %v1469 = vrot.slane %v1468, 4
      %v1471 = vshll.u32 %v1398, 16
      %v1473 = vrot.slane %v1471, 5
      %v1474 = vsel %vm468, %v1469, %v1473
      %v1476 = vshrl.u32 %v1399, 16
      %v1478 = vrot.slane %v1476, 4
      %v1479 = vshll.u32 %v1399, 16
      %v1481 = vrot.slane %v1479, 5
      %v1482 = vor.u32 %v1478, %v1481
      %v1483 = vrot.slane %v1482, 4
      %v1485 = vshll.u32 %v1400, 16
      %v1487 = vrot.slane %v1485, 5
      %v1488 = vsel %vm468, %v1483, %v1487
      %v1490 = vshrl.u32 %v1401, 16
      %v1492 = vrot.slane %v1490, 4
      %v1493 = vshll.u32 %v1401, 16
      %v1495 = vrot.slane %v1493, 5
      %v1496 = vor.u32 %v1492, %v1495
      %v1497 = vrot.slane %v1496, 4
      %v1499 = vshll.u32 %v1402, 16
      %v1501 = vrot.slane %v1499, 5
      %v1502 = vsel %vm468, %v1497, %v1501
      %v1504 = vshrl.u32 %v1403, 16
      %v1506 = vrot.slane %v1504, 4
      %v1507 = vshll.u32 %v1403, 16
      %v1509 = vrot.slane %v1507, 5
      %v1510 = vor.u32 %v1506, %v1509
      %v1511 = vrot.slane %v1510, 4
      %v1513 = vshll.u32 %v1404, 16
      %v1515 = vrot.slane %v1513, 5
      %v1516 = vsel %vm468, %v1511, %v1515
      %s1517 = scalar_lea.vmem %s215, 16
      %v1518 = vld [vmem:[%s1517] sm:$0x3]
      %v1519 = vunpack.c.l.b16 %v1418
      %v1520 = vunpack.c.l.b16 %v1432
      %v1521 = vunpack.c.l.b16 %v1446
      %v1522 = vunpack.c.l.b16 %v1460
      %v1523 = vunpack.c.l.b16 %v1474
      %v1524 = vunpack.c.l.b16 %v1488
      %v1525 = vunpack.c.l.b16 %v1502
      %v1526 = vunpack.c.l.b16 %v1516
      %v1527 = vpack.c.b16 %v1520, %v1519
      %v1528 = vpack.c.b16 %v1522, %v1521
      %v1529 = vpack.c.b16 %v1524, %v1523
      %v1530 = vpack.c.b16 %v1526, %v1525
      %v1532 = vsel %vm268, %v1527, 0
      %v1535 = vsel %vm268, %v1528, 0
      %v1538 = vsel %vm268, %v1529, 0
      %v1541 = vsel %vm268, %v1530, 0
      %v1544 = vsel %vm281, %v1518, 0
      %1546 = vmatprep.subr.bf16.mxu0 0
      %1547 = vmatpush1.bf16.msra.mxu0 0
      %1548 = vmatprep.subr.bf16.mxu0 0
      %1549 = vmatpush1.bf16.msra.mxu0 0
      %1550 = vmatprep.subr.bf16.mxu0 0
      %1551 = vmatpush1.bf16.msra.mxu0 0
      %1552 = vmatprep.subr.bf16.mxu0 0
      %1553 = vmatpush1.bf16.msra.mxu0 0
      %1554 = vmatprep.subr.bf16.mxu0 0
      %1555 = vmatpush1.bf16.msra.mxu0 0
      %1556 = vmatprep.subr.bf16.mxu0 0
      %1557 = vmatpush1.bf16.msra.mxu0 0
      %1558 = vmatprep.subr.bf16.mxu0 0
      %1559 = vmatpush1.bf16.msra.mxu0 0
      %1560 = vmatprep.subr.bf16.mxu0 0
      %1561 = vmatpush1.bf16.msra.mxu0 %v1544
      %1562 = vmatprep.subr.bf16.mxu0 0
      %1563 = vmatpush2.bf16.msra.mxu0 0
      %1564 = vmatprep.subr.bf16.mxu0 0
      %1565 = vmatpush2.bf16.msra.mxu0 0
      %1566 = vmatprep.subr.bf16.mxu0 0
      %1567 = vmatpush2.bf16.msra.mxu0 0
      %1568 = vmatprep.subr.bf16.mxu0 0
      %1569 = vmatpush2.bf16.msra.mxu0 0
      %1570 = vmatprep.subr.bf16.mxu0 0
      %1571 = vmatpush2.bf16.msra.mxu0 0
      %1572 = vmatprep.subr.bf16.mxu0 0
      %1573 = vmatpush2.bf16.msra.mxu0 0
      %1574 = vmatprep.subr.bf16.mxu0 0
      %1575 = vmatpush2.bf16.msra.mxu0 0
      %1576 = vmatprep.subr.bf16.mxu0 0
      %1577 = vmatpush2.bf16.msra.mxu0 0
      %1578 = vmatprep.mubr.bf16.mxu0 0
      %1579 = vmatmul.mubr.bf16.gmra.mxu0 %v1532
      %v1580 = vpop.f32.mrf.mxu0
      %v1581 = vadd.f32 0.0, %v1580
      %v1582 = vpop.f32.mrf.mxu0
      %v1583 = vpop.f32.mrf.mxu0
      %v1584 = vadd.f32 0.0, %v1583
      %v1585 = vpop.f32.mrf.mxu0
      %1586 = vmatprep.mubr.bf16.mxu0 0
      %1587 = vmatmul.mubr.bf16.gmra.mxu0 %v1535
      %v1588 = vpop.f32.mrf.mxu0
      %v1589 = vadd.f32 0.0, %v1588
      %v1590 = vpop.f32.mrf.mxu0
      %v1591 = vpop.f32.mrf.mxu0
      %v1592 = vadd.f32 0.0, %v1591
      %v1593 = vpop.f32.mrf.mxu0
      %1594 = vmatprep.mubr.bf16.mxu0 0
      %1595 = vmatmul.mubr.bf16.gmra.mxu0 %v1538
      %v1596 = vpop.f32.mrf.mxu0
      %v1597 = vadd.f32 0.0, %v1596
      %v1598 = vpop.f32.mrf.mxu0
      %v1599 = vpop.f32.mrf.mxu0
      %v1600 = vadd.f32 0.0, %v1599
      %v1601 = vpop.f32.mrf.mxu0
      %1602 = vmatprep.mubr.bf16.mxu0 0
      %1603 = vmatmul.mubr.bf16.gmra.mxu0 %v1541
      %v1604 = vpop.f32.mrf.mxu0
      %v1605 = vadd.f32 0.0, %v1604
      %v1606 = vpop.f32.mrf.mxu0
      %v1607 = vpop.f32.mrf.mxu0
      %v1608 = vadd.f32 0.0, %v1607
      %v1609 = vpop.f32.mrf.mxu0
      %1610 = vdwg.mxu0
      %v1611 = vadd.f32 %v1381, %v1581
      %v1612 = vadd.f32 %v1382, %v1584
      %v1613 = vadd.f32 %v1383, %v1589
      %v1614 = vadd.f32 %v1384, %v1592
      %v1615 = vadd.f32 %v1385, %v1597
      %v1616 = vadd.f32 %v1386, %v1600
      %v1617 = vadd.f32 %v1387, %v1605
      %v1618 = vadd.f32 %v1388, %v1608
      %v1619 = vld [vmem:[%s218] sm:$0x1]
      %v1621 = vlaneseq
      %v1622 = vshrl.u32 %v1621, 7
      %v1623 = vsub.s32 0, %v1622
      %v1624 = vrot.slane %v1619, %v1623
      %v1626 = vadd.f32 %v1611, %v1624
      %v1627 = vadd.f32 %v1612, %v1624
      %v1628 = vadd.f32 %v1613, %v1624
      %v1629 = vadd.f32 %v1614, %v1624
      %v1630 = vadd.f32 %v1615, %v1624
      %v1631 = vadd.f32 %v1616, %v1624
      %v1632 = vadd.f32 %v1617, %v1624
      %v1633 = vadd.f32 %v1618, %v1624
      %v1634 = vmax.f32 %v1626, 0.0
      %v1635 = vmax.f32 %v1627, 0.0
      %v1636 = vmax.f32 %v1628, 0.0
      %v1637 = vmax.f32 %v1629, 0.0
      %v1638 = vmax.f32 %v1630, 0.0
      %v1639 = vmax.f32 %v1631, 0.0
      %v1640 = vmax.f32 %v1632, 0.0
      %v1641 = vmax.f32 %v1633, 0.0
      %v1642 = vpack.c.bf16 %v1635, %v1634
      %v1643 = vpack.c.bf16 %v1637, %v1636
      %v1644 = vpack.c.bf16 %v1639, %v1638
      %v1645 = vpack.c.bf16 %v1641, %v1640
      %v1650 = vunpack.c.l.b16 %v1642
      %v1651 = vunpack.c.h.b16 %v1642
      %v1652 = vunpack.c.l.b16 %v1643
      %v1653 = vunpack.c.h.b16 %v1643
      %v1654 = vunpack.c.l.b16 %v1644
      %v1655 = vunpack.c.h.b16 %v1644
      %v1656 = vunpack.c.l.b16 %v1645
      %v1657 = vunpack.c.h.b16 %v1645
      %v1658 = vpack.c.b16 %v1650, %v1650
      %v1659 = vpack.c.b16 %v1651, %v1651
      %v1660 = vpack.c.b16 %v1652, %v1652
      %v1661 = vpack.c.b16 %v1653, %v1653
      %v1662 = vpack.c.b16 %v1654, %v1654
      %v1663 = vpack.c.b16 %v1655, %v1655
      %v1664 = vpack.c.b16 %v1656, %v1656
      %v1665 = vpack.c.b16 %v1657, %v1657
      %vm1674 = vcmask 60416
      %1675 = vst.msk [vmem:[%s226] sm:$0xf] %vm1674, %v1658
      %1676 = vst.msk [vmem:[%s226 + $0x4] sm:$0xf] %vm1674, %v1659
      %1677 = vst.msk [vmem:[%s226 + $0x8] sm:$0xf] %vm1674, %v1660
      %1678 = vst.msk [vmem:[%s226 + $0xc] sm:$0xf] %vm1674, %v1661
      %1679 = vst.msk [vmem:[%s226 + $0x10] sm:$0xf] %vm1674, %v1662
      %1680 = vst.msk [vmem:[%s226 + $0x14] sm:$0xf] %vm1674, %v1663
      %1681 = vst.msk [vmem:[%s226 + $0x18] sm:$0xf] %vm1674, %v1664
      %1682 = vst.msk [vmem:[%s226 + $0x1c] sm:$0xf] %vm1674, %v1665
      %p1683 = scmp.lt.s32.totalorder %s18, 1
      %s1684 = scalar_select %p1683, %s18, 1
      %p1685 = scmp.lt.s32.totalorder %s19, 0
      %s1686 = scalar_select %p1685, %s19, 0
      %s1687 = smul.addr %s1684, 8
      %s1688 = sadd.s32 %s1686, %s1687
      %s1689 = smul.addr %s1688, 4
      %s1690 = scalar_lea.vmem %s3, %s1689
      // Predicated region
      $region33: #{tpu_custom_call.1} parent=31 // pred_check
        %p1691 = pneg %p124
      $region34: #{tpu_custom_call.1} parent=31 // pred_check_branch
        %1693 = sbr.rel (%p1691) target = $region36
      $region35: #{tpu_custom_call.1} parent=31 // pred_region
        _
      $region36: #{tpu_custom_call.1} parent=31 // pred_fallthru
        _
    $region32: #{tpu_custom_call.1} parent=5 // pred_fallthru
      _
    %p1694 = scmp.le.s32.totalorder 2, %s9
    // Predicated region
    $region37: #{tpu_custom_call.1} parent=5 // pred_check
      %p1695 = pneg %p1694
    $region38: #{tpu_custom_call.1} parent=5 // pred_check_branch
      %1697 = sbr.rel (%p1695) target = $region40
    $region39: #{tpu_custom_call.1} parent=5 // pred_region
      %s1698 = ssub.s32 %s9, 2
      // Predicated region
      $region41: #{tpu_custom_call.1} parent=39 // pred_check
        %p1699 = pneg %p130
      $region42: #{tpu_custom_call.1} parent=39 // pred_check_branch
        %1701 = sbr.rel (%p1699) target = $region44
      $region43: #{tpu_custom_call.1} parent=39 // pred_region
        %p1702 = scmp.lt.s32.totalorder %s20, 1
        %s1703 = scalar_select %p1702, %s20, 1
        %p1704 = scmp.lt.s32.totalorder %s21, 0
        %s1705 = scalar_select %p1704, %s21, 0
        %s1706 = smul.addr %s1703, 8
        %s1707 = sadd.s32 %s1705, %s1706
        %s1708 = smul.addr %s1707, 4
        %s1709 = scalar_lea.vmem %s3, %s1708
      $region44: #{tpu_custom_call.1} parent=39 // pred_fallthru
        _
    $region40: #{tpu_custom_call.1} parent=5 // pred_fallthru
      _
  $region6: #{tpu_custom_call.1} parent=0 // loop_footer
    %s13 = sadd.s32 1, %s9
  $region7: #{tpu_custom_call.1} parent=0 // loop_footer_branch
    %8 = sbr.rel target = $region3
  $region8: #{tpu_custom_call.1} parent=0 // loop_exit
    _

</llo_original>
